<compile_context>
chip_gen: v5e
topology: v5e:2x2
jax: 0.10.0
libtpu: 0.0.40
codegen_flags: <defaults>
</compile_context>

<pallas_src>
import math

import jax
import jax.numpy as jnp
from jax.experimental import pallas as pl
from jax.experimental.pallas import tpu as pltpu


def _flava_kernel(x_ref, w1_ref, b1_ref, w2_ref, b2_ref, logits_ref, embed_ref):
    """One batch tile: mean over seq -> Linear(768,512) -> Linear(512,C_pad)."""
    BM, S, D = x_ref.shape

    # ---- streamed sequence mean (f32 accumulation over bf16/f32 input) -------
    seq_chunk = min(S, 8)
    n_full = S // seq_chunk
    rem = S - n_full * seq_chunk

    def body(i, acc):
        start = pl.multiple_of(i * seq_chunk, seq_chunk)
        chunk = x_ref[:, pl.ds(start, seq_chunk), :].astype(jnp.float32)
        return acc + jnp.sum(chunk, axis=1)

    acc = jax.lax.fori_loop(
        0, n_full, body, jnp.zeros((BM, D), jnp.float32),
        unroll=True if n_full <= 16 else False,
    )
    if rem:
        tail = x_ref[:, pl.ds(n_full * seq_chunk, rem), :].astype(jnp.float32)
        acc = acc + jnp.sum(tail, axis=1)
    x_mean = acc * (1.0 / S)                                    # (BM, D) f32

    # ---- lin: 768 -> 512 ------------------------------------------------------
    embed = (
        jnp.dot(x_mean, w1_ref[...], preferred_element_type=jnp.float32)
        + b1_ref[...]
    )                                                           # (BM, H) f32
    embed_ref[...] = embed.astype(embed_ref.dtype)

    # ---- project: 512 -> C_pad (zero-padded, lane-dense output) --------------
    logits = (
        jnp.dot(embed, w2_ref[...], preferred_element_type=jnp.float32)
        + b2_ref[...]
    )                                                           # (BM, C_pad) f32
    logits_ref[...] = logits.astype(logits_ref.dtype)


def flava_pallas(x_embed, w1, b1, w2, b2, *, compute_dtype=jnp.bfloat16, bm=None):
    """mean-pool + lin + project in one batch-tiled Pallas call.

    x_embed: (B, S, 768)
    w1: (768, 512), b1: (512,)   (weights stored [in, out], i.e. W_torch.T)
    w2: (512, C),   b2: (C,)
    Returns (logits (B, C) f32, embed (B, 512) f32).
    """
    B, S, D = x_embed.shape
    H = w1.shape[1]
    C = w2.shape[1]
    C_pad = 128 * pl.cdiv(C, 128)                 # lane-dense logits tile

    # Zero-pad the projection so padded logits columns are exactly 0.
    w2p = jnp.zeros((H, C_pad), jnp.float32).at[:, :C].set(w2.astype(jnp.float32))
    b2p = jnp.zeros((1, C_pad), jnp.float32).at[:, :C].set(b2.astype(jnp.float32))
    w1f = w1.astype(jnp.float32)
    b1r = b1.astype(jnp.float32).reshape(1, H)

    # HBM-bound kernel: move x in bf16, accumulate in f32 inside the kernel.
    x = x_embed.astype(compute_dtype)
    itemsize = jnp.dtype(compute_dtype).itemsize

    # Batch tile: keep 2x (double-buffered) input tiles under ~16 MiB so the
    # kernel fits v7x's 64 MiB VMEM with headroom (v5e/v6e trivially).
    if bm is None:
        budget = 16 * 1024 * 1024
        bm = max(1, budget // (2 * S * D * itemsize))
        bm = min(bm, 128)
    if bm >= B:
        BM = B
    else:
        BM = max(8, (bm // 8) * 8)                # keep output sublane dim aligned
    grid = (pl.cdiv(B, BM),)

    x_tile_bytes = BM * S * D * itemsize
    w_bytes = (D * H + H + H * C_pad + C_pad) * 4
    o_tile_bytes = BM * (C_pad + H) * 4
    vmem_limit = int(min(2 * x_tile_bytes + 2 * w_bytes + 2 * o_tile_bytes
                         + (8 << 20), 64 << 20))

    cost = pl.CostEstimate(
        flops=2 * B * (S * D + D * H + H * C_pad),
        transcendentals=0,
        bytes_accessed=B * S * D * itemsize + w_bytes + B * (C_pad + H) * 4,
    )

    logits_pad, embed = pl.pallas_call(
        _flava_kernel,
        grid=grid,
        out_shape=(
            jax.ShapeDtypeStruct((B, C_pad), jnp.float32),
            jax.ShapeDtypeStruct((B, H), jnp.float32),
        ),
        in_specs=[
            pl.BlockSpec((BM, S, D), lambda i: (i, 0, 0)),      # x: batch-tiled
            pl.BlockSpec((D, H), lambda i: (0, 0)),             # w1: resident
            pl.BlockSpec((1, H), lambda i: (0, 0)),             # b1
            pl.BlockSpec((H, C_pad), lambda i: (0, 0)),         # w2 (padded)
            pl.BlockSpec((1, C_pad), lambda i: (0, 0)),         # b2 (padded)
        ],
        out_specs=(
            pl.BlockSpec((BM, C_pad), lambda i: (i, 0)),
            pl.BlockSpec((BM, H), lambda i: (i, 0)),
        ),
        compiler_params=pltpu.CompilerParams(
            dimension_semantics=("parallel",),
            vmem_limit_bytes=vmem_limit,
        ),
        cost_estimate=cost,
    )(x, w1f, b1r, w2p, b2p)

    return logits_pad[:, :C], embed


def flava_forward(x_embed, params):
    """Full module forward, mirroring the PyTorch return structure."""
    logits, embed = flava_pallas(
        x_embed, params["w1"], params["b1"], params["w2"], params["b2"]
    )
    # adv heads (empty for the default adv=[] configuration) are tiny GEMVs;
    # they are applied to the kernel-produced embed in plain JAX.
    adv_outputs = [embed @ w + b for (w, b) in params.get("adv", [])]
    return (logits, [0, 0, 0, embed[:, :, None, None]], embed, adv_outputs)


def _torch_linear_init(key, in_features, out_features):
    """Deterministic init matching nn.Linear's default bounds."""
    kw, kb = jax.random.split(key)
    bound = 1.0 / math.sqrt(in_features)
    # Stored as (in, out) so kernel computes x @ W (== x @ W_torch.T).
    w = jax.random.uniform(
        kw, (in_features, out_features), jnp.float32, -bound, bound
    )
    b = jax.random.uniform(kb, (out_features,), jnp.float32, -bound, bound)
    return w, b


def init_params(key, num_classes=3, adv=()):
    keys = jax.random.split(key, 2 + len(adv))
    w1, b1 = _torch_linear_init(keys[0], 768, 512)
    w2, b2 = _torch_linear_init(keys[1], 512, num_classes)
    adv_params = [
        _torch_linear_init(keys[2 + i], 512, cls) for i, cls in enumerate(adv)
    ]
    return {"w1": w1, "b1": b1, "w2": w2, "b2": b2, "adv": adv_params}


if __name__ == "__main__":
    key = jax.random.PRNGKey(0)
    k_params, k_x = jax.random.split(key)

    num_classes = 3
    B, S, D = 2, 8, 768   # D=768 fixed by the module's nn.Linear(768, 512)
    params = init_params(k_params, num_classes=num_classes)
    x_embed = jax.random.normal(k_x, (B, S, D), jnp.float32)

    logits, extras, embed, adv_outputs = flava_forward(x_embed, params)
    jax.block_until_ready((logits, embed, extras[3]))

    # Reference in plain JAX with the same bf16 input cast used by the kernel.
    x_bf = x_embed.astype(jnp.bfloat16).astype(jnp.float32)
    x_mean = jnp.mean(x_bf, axis=1)
    embed_ref = x_mean @ params["w1"] + params["b1"]
    logits_ref = embed_ref @ params["w2"] + params["b2"]

    assert logits.shape == (B, num_classes)
    assert embed.shape == (B, 512)
    assert extras[3].shape == (B, 512, 1, 1)
    assert adv_outputs == []
    assert jnp.allclose(embed, embed_ref, atol=2e-2, rtol=2e-2)
    assert jnp.allclose(logits, logits_ref, atol=2e-2, rtol=2e-2)

    print("KERNEL_OK")
</pallas_src>

<mosaic_0001>
module attributes {stable_mosaic.version = 11 : i64} {
  func.func @_flava_kernel(%arg0: i32, %arg1: memref<2x8x768xbf16, #tpu.memory_space<vmem>>, %arg2: memref<768x512xf32, #tpu.memory_space<vmem>>, %arg3: memref<1x512xf32, #tpu.memory_space<vmem>>, %arg4: memref<512x128xf32, #tpu.memory_space<vmem>>, %arg5: memref<1x128xf32, #tpu.memory_space<vmem>>, %arg6: memref<2x128xf32, #tpu.memory_space<vmem>>, %arg7: memref<2x512xf32, #tpu.memory_space<vmem>>) attributes {dimension_semantics = [#tpu.dimension_semantics<parallel>], iteration_bounds = array<i64: 1>, scalar_prefetch = 0 : i64, scratch_operands = 0 : i64, tpu.core_type = #tpu.core_type<tc>, window_params = [{transform_indices = @transform_0, window_bounds = array<i64: 2, 8, 768>}, {pipeline_mode = #tpu.pipeline_mode<synchronous>, transform_indices = @transform_1, window_bounds = array<i64: 768, 512>}, {pipeline_mode = #tpu.pipeline_mode<synchronous>, transform_indices = @transform_2, window_bounds = array<i64: 1, 512>}, {pipeline_mode = #tpu.pipeline_mode<synchronous>, transform_indices = @transform_3, window_bounds = array<i64: 512, 128>}, {pipeline_mode = #tpu.pipeline_mode<synchronous>, transform_indices = @transform_4, window_bounds = array<i64: 1, 128>}, {transform_indices = @transform_5, window_bounds = array<i64: 2, 128>}, {transform_indices = @transform_6, window_bounds = array<i64: 2, 512>}]} {
    %cst = arith.constant 0.000000e+00 : f32
    %0 = vector.broadcast %cst : f32 to vector<2x768xf32>
    %c0_i32 = arith.constant 0 : i32
    %c8_i32 = arith.constant 8 : i32
    %1 = arith.muli %c0_i32, %c8_i32 : i32
    %2 = tpu.assume_multiple %1, 8 : i32
    %c0 = arith.constant 0 : index
    %3 = arith.index_cast %2 : i32 to index
    %c0_0 = arith.constant 0 : index
    %4 = vector.load %arg1[%c0, %3, %c0_0] : memref<2x8x768xbf16, #tpu.memory_space<vmem>>, vector<2x8x768xbf16>
    %5 = arith.extf %4 : vector<2x8x768xbf16> to vector<2x8x768xf32>
    %cst_1 = arith.constant dense<0.000000e+00> : vector<2x768xf32>
    %6 = vector.multi_reduction <add>, %5, %cst_1 [1] : vector<2x8x768xf32> to vector<2x768xf32>
    %7 = arith.addf %0, %6 : vector<2x768xf32>
    %c1_i32 = arith.constant 1 : i32
    %cst_2 = arith.constant 1.250000e-01 : f32
    %8 = vector.broadcast %cst_2 : f32 to vector<2x768xf32>
    %9 = arith.mulf %7, %8 : vector<2x768xf32>
    %c0_3 = arith.constant 0 : index
    %c0_4 = arith.constant 0 : index
    %10 = vector.load %arg2[%c0_3, %c0_4] : memref<768x512xf32, #tpu.memory_space<vmem>>, vector<768x512xf32>
    %cst_5 = arith.constant dense<0.000000e+00> : vector<2x512xf32>
    %11 = tpu.matmul %9, %10, %cst_5 {dimension_numbers = #tpu.dot_dimension_numbers<[1], [0], [0], [1], [0, 0, 1, 1], [], []>} : vector<2x768xf32>, vector<768x512xf32>, vector<2x512xf32> -> vector<2x512xf32>
    %c0_6 = arith.constant 0 : index
    %c0_7 = arith.constant 0 : index
    %12 = vector.load %arg3[%c0_6, %c0_7] : memref<1x512xf32, #tpu.memory_space<vmem>>, vector<1x512xf32>
    %13 = vector.broadcast %12 : vector<1x512xf32> to vector<2x512xf32>
    %14 = arith.addf %11, %13 : vector<2x512xf32>
    %c0_8 = arith.constant 0 : index
    %c0_9 = arith.constant 0 : index
    %15 = vector.load %arg7[%c0_8, %c0_9] : memref<2x512xf32, #tpu.memory_space<vmem>>, vector<2x512xf32>
    tpu.vector_store %arg7[%c0_8, %c0_9], %14 {strides = array<i32>} : memref<2x512xf32, #tpu.memory_space<vmem>>, vector<2x512xf32>,
    %c0_10 = arith.constant 0 : index
    %c0_11 = arith.constant 0 : index
    %16 = vector.load %arg4[%c0_10, %c0_11] : memref<512x128xf32, #tpu.memory_space<vmem>>, vector<512x128xf32>
    %cst_12 = arith.constant dense<0.000000e+00> : vector<2x128xf32>
    %17 = tpu.matmul %14, %16, %cst_12 {dimension_numbers = #tpu.dot_dimension_numbers<[1], [0], [0], [1], [0, 0, 1, 1], [], []>} : vector<2x512xf32>, vector<512x128xf32>, vector<2x128xf32> -> vector<2x128xf32>
    %c0_13 = arith.constant 0 : index
    %c0_14 = arith.constant 0 : index
    %18 = vector.load %arg5[%c0_13, %c0_14] : memref<1x128xf32, #tpu.memory_space<vmem>>, vector<1x128xf32>
    %19 = vector.broadcast %18 : vector<1x128xf32> to vector<2x128xf32>
    %20 = arith.addf %17, %19 : vector<2x128xf32>
    %c0_15 = arith.constant 0 : index
    %c0_16 = arith.constant 0 : index
    %21 = vector.load %arg6[%c0_15, %c0_16] : memref<2x128xf32, #tpu.memory_space<vmem>>, vector<2x128xf32>
    tpu.vector_store %arg6[%c0_15, %c0_16], %20 {strides = array<i32>} : memref<2x128xf32, #tpu.memory_space<vmem>>, vector<2x128xf32>,
    return
  }
  func.func @transform_0(%arg0: i32) -> (i32, i32, i32) {
    %c0_i32 = arith.constant 0 : i32
    %c0_i32_0 = arith.constant 0 : i32
    %c0_i32_1 = arith.constant 0 : i32
    return %arg0, %c0_i32, %c0_i32_0 : i32, i32, i32
  }
  func.func @transform_1(%arg0: i32) -> (i32, i32) {
    %c0_i32 = arith.constant 0 : i32
    %c0_i32_0 = arith.constant 0 : i32
    %c0_i32_1 = arith.constant 0 : i32
    return %c0_i32, %c0_i32_0 : i32, i32
  }
  func.func @transform_2(%arg0: i32) -> (i32, i32) {
    %c0_i32 = arith.constant 0 : i32
    %c0_i32_0 = arith.constant 0 : i32
    %c0_i32_1 = arith.constant 0 : i32
    return %c0_i32, %c0_i32_0 : i32, i32
  }
  func.func @transform_3(%arg0: i32) -> (i32, i32) {
    %c0_i32 = arith.constant 0 : i32
    %c0_i32_0 = arith.constant 0 : i32
    %c0_i32_1 = arith.constant 0 : i32
    return %c0_i32, %c0_i32_0 : i32, i32
  }
  func.func @transform_4(%arg0: i32) -> (i32, i32) {
    %c0_i32 = arith.constant 0 : i32
    %c0_i32_0 = arith.constant 0 : i32
    %c0_i32_1 = arith.constant 0 : i32
    return %c0_i32, %c0_i32_0 : i32, i32
  }
  func.func @transform_5(%arg0: i32) -> (i32, i32) {
    %c0_i32 = arith.constant 0 : i32
    %c0_i32_0 = arith.constant 0 : i32
    return %arg0, %c0_i32 : i32, i32
  }
  func.func @transform_6(%arg0: i32) -> (i32, i32) {
    %c0_i32 = arith.constant 0 : i32
    %c0_i32_0 = arith.constant 0 : i32
    return %arg0, %c0_i32 : i32, i32
  }
}

</mosaic_0001>

<llo_original>
// kernel: tpu_custom_call.1
$region0: #{tpu_custom_call.1}
  #allocation0 [shape = 'u32[]', space=smem, size = 0x4, offset = 0x4, fixed_abs, tag = 'smem constant byte address 0x4 - core index']
  #allocation1 [shape = 'u32[72,128]{1,0:T(1,128)}', space=vmem, size = 0x9000, scoped, tag = 'internal scratch']
  %s0 = inlined_call_operand.hbm [shape: bf16[2,8,768], index: 0, kind: input, shape index: {}]
  %s1 = inlined_call_operand.hbm [shape: f32[768,512], index: 1, kind: input, shape index: {}]
  %s2 = inlined_call_operand.hbm [shape: f32[1,512], index: 2, kind: input, shape index: {}]
  %s3 = inlined_call_operand.hbm [shape: f32[512,128], index: 3, kind: input, shape index: {}]
  %s4 = inlined_call_operand.hbm [shape: f32[1,128], index: 4, kind: input, shape index: {}]
  %s5 = inlined_call_operand.hbm [shape: f32[2,128], index: 5, kind: output, shape index: {0}]
  %s6 = inlined_call_operand.hbm [shape: f32[2,512], index: 6, kind: output, shape index: {1}]
  %7 = xla_tuple %s5, %s6
  %s8 = sld [smem:[#allocation0]]
  $region58: #{tpu_custom_call.1} parent=0
    _
  %s10 = ssub.s32 1, %s8
  %s11 = scalar_select 0, %s10, %s8
  $region1: #{tpu_custom_call.1} parent=0
    #allocation2 [shape = 'u8[24576]{0}', space=vmem, size = 0x6000, scoped, tag = 'input window, operand 0, single buffered']
    #allocation3 [shape = 's32[1]{0}', space=sflag, size = 0x4, scoped, tag = 'scoped memory for tpu_custom_call.1']
    #allocation4 [shape = 's32[1]{0}', space=sflag, size = 0x4, scoped, tag = 'scoped memory for tpu_custom_call.1']
    #allocation5 [shape = 'u8[1572864]{0}', space=vmem, size = 0x180000, scoped, tag = 'input window, operand 1, single buffered']
    #allocation6 [shape = 's32[1]{0}', space=sflag, size = 0x4, scoped, tag = 'scoped memory for tpu_custom_call.1']
    #allocation7 [shape = 'u8[2048]{0}', space=vmem, size = 0x800, scoped, tag = 'input window, operand 2, single buffered']
    #allocation8 [shape = 'u8[262144]{0}', space=vmem, size = 0x40000, scoped, tag = 'input window, operand 3, single buffered']
    #allocation9 [shape = 's32[1]{0}', space=sflag, size = 0x4, scoped, tag = 'scoped memory for tpu_custom_call.1']
    #allocation10 [shape = 'u8[512]{0}', space=vmem, size = 0x400, scoped, tag = 'input window, operand 4, single buffered']
    #allocation11 [shape = 'u8[1024]{0}', space=vmem, size = 0x400, scoped, tag = 'output window, operand 0, single buffered']
    #allocation12 [shape = 'u8[4096]{0}', space=vmem, size = 0x1000, scoped, tag = 'output window, operand 1, single buffered']
    #allocation13 [shape = 's32[1]{0}', space=sflag, size = 0x4, scoped, tag = 'scoped memory for tpu_custom_call.1']
    %12 = vsyncpa [#allocation3], 0
    %13 = vsyncpa [#allocation6], 0
    %14 = vsyncpa [#allocation9], 0
    %15 = vsyncpa [#allocation4], 0
    %16 = vsyncpa [#allocation13], 0
    // Predicated region
    $region2: #{tpu_custom_call.1} parent=1 // pred_check
      _
    $region3: #{tpu_custom_call.1} parent=1 // pred_check_branch
      %18 = sbr.rel (0) target = $region5
    $region4: #{tpu_custom_call.1} parent=1 // pred_region
      %20 = vsyncadd [#allocation3], 0
      %s21 = sshll.u32 %s0, 4
      %s22 = int_to_ptr.hbm [resolvable:$true] %s21
      %s23 = sshll.u32 [#allocation2], 4
      %s24 = int_to_ptr.vmem [resolvable:$true] %s23
      %29 = dma.hbm_to_vmem [thread:$0]  %s22, 768, %s24, [#allocation3], 384, 384, 24
    $region5: #{tpu_custom_call.1} parent=1 // pred_fallthru
      _
    // Predicated region
    $region6: #{tpu_custom_call.1} parent=1 // pred_check
      _
    $region7: #{tpu_custom_call.1} parent=1 // pred_check_branch
      %31 = sbr.rel (0) target = $region9
    $region8: #{tpu_custom_call.1} parent=1 // pred_region
      %33 = vsyncadd [#allocation6], 0
      %s34 = sshll.u32 %s1, 4
      %s35 = int_to_ptr.hbm [resolvable:$true] %s34
      %s36 = sshll.u32 [#allocation5], 4
      %s37 = int_to_ptr.vmem [resolvable:$true] %s36
      %42 = dma.hbm_to_vmem [thread:$0]  %s35, 49152, %s37, [#allocation6], 512, 512, 32
    $region9: #{tpu_custom_call.1} parent=1 // pred_fallthru
      _
    // Predicated region
    $region10: #{tpu_custom_call.1} parent=1 // pred_check
      _
    $region11: #{tpu_custom_call.1} parent=1 // pred_check_branch
      %44 = sbr.rel (0) target = $region13
    $region12: #{tpu_custom_call.1} parent=1 // pred_region
      %46 = vsyncadd [#allocation6], 0
      %s48 = sshll.u32 %s2, 4
      %s49 = int_to_ptr.hbm [resolvable:$true] %s48
      %s50 = sshll.u32 [#allocation7], 4
      %s51 = int_to_ptr.vmem [resolvable:$true] %s50
      %53 = dma.hbm_to_vmem [thread:$0]  %s49, 64, %s51, [#allocation6]
    $region13: #{tpu_custom_call.1} parent=1 // pred_fallthru
      _
    // Predicated region
    $region14: #{tpu_custom_call.1} parent=1 // pred_check
      _
    $region15: #{tpu_custom_call.1} parent=1 // pred_check_branch
      %55 = sbr.rel (0) target = $region17
    $region16: #{tpu_custom_call.1} parent=1 // pred_region
      %57 = vsyncadd [#allocation9], 0
      %s58 = sshll.u32 %s3, 4
      %s59 = int_to_ptr.hbm [resolvable:$true] %s58
      %s60 = sshll.u32 [#allocation8], 4
      %s61 = int_to_ptr.vmem [resolvable:$true] %s60
      %66 = dma.hbm_to_vmem [thread:$0]  %s59, 8192, %s61, [#allocation9], 128, 128, 8
    $region17: #{tpu_custom_call.1} parent=1 // pred_fallthru
      _
    // Predicated region
    $region18: #{tpu_custom_call.1} parent=1 // pred_check
      _
    $region19: #{tpu_custom_call.1} parent=1 // pred_check_branch
      %68 = sbr.rel (0) target = $region21
    $region20: #{tpu_custom_call.1} parent=1 // pred_region
      %70 = vsyncadd [#allocation9], 0
      %s72 = sshll.u32 %s4, 4
      %s73 = int_to_ptr.hbm [resolvable:$true] %s72
      %s74 = sshll.u32 [#allocation10], 4
      %s75 = int_to_ptr.vmem [resolvable:$true] %s74
      %77 = dma.hbm_to_vmem [thread:$0]  %s73, 16, %s75, [#allocation9]
    $region21: #{tpu_custom_call.1} parent=1 // pred_fallthru
      _
    // Predicated region
    $region22: #{tpu_custom_call.1} parent=1 // pred_check
      _
    $region23: #{tpu_custom_call.1} parent=1 // pred_check_branch
      %79 = sbr.rel (0) target = $region25
    $region24: #{tpu_custom_call.1} parent=1 // pred_region
      %81 = dma.done [#allocation3], 768
    $region25: #{tpu_custom_call.1} parent=1 // pred_fallthru
      _
    // Predicated region
    $region26: #{tpu_custom_call.1} parent=1 // pred_check
      _
    $region27: #{tpu_custom_call.1} parent=1 // pred_check_branch
      %83 = sbr.rel (0) target = $region29
    $region28: #{tpu_custom_call.1} parent=1 // pred_region
      %85 = dma.done [#allocation6], 49152
    $region29: #{tpu_custom_call.1} parent=1 // pred_fallthru
      _
    // Predicated region
    $region30: #{tpu_custom_call.1} parent=1 // pred_check
      _
    $region31: #{tpu_custom_call.1} parent=1 // pred_check_branch
      %87 = sbr.rel (0) target = $region33
    $region32: #{tpu_custom_call.1} parent=1 // pred_region
      %89 = dma.done [#allocation6], 64
    $region33: #{tpu_custom_call.1} parent=1 // pred_fallthru
      _
    // Predicated region
    $region34: #{tpu_custom_call.1} parent=1 // pred_check
      _
    $region35: #{tpu_custom_call.1} parent=1 // pred_check_branch
      %91 = sbr.rel (0) target = $region37
    $region36: #{tpu_custom_call.1} parent=1 // pred_region
      %93 = dma.done [#allocation9], 8192
    $region37: #{tpu_custom_call.1} parent=1 // pred_fallthru
      _
    // Predicated region
    $region38: #{tpu_custom_call.1} parent=1 // pred_check
      _
    $region39: #{tpu_custom_call.1} parent=1 // pred_check_branch
      %95 = sbr.rel (0) target = $region41
    $region40: #{tpu_custom_call.1} parent=1 // pred_region
      %97 = dma.done [#allocation9], 16
    $region41: #{tpu_custom_call.1} parent=1 // pred_fallthru
      _
    %s98 = smul.u32 0, 6
    %s99 = smul.addr %s98, 4
    %s100 = scalar_lea.vmem [#allocation2], %s99
    %v101 = vld [vmem:[%s100] sm:$0xff]
    %v102 = vld [vmem:[%s100 + $0x8] sm:$0xff]
    %v103 = vld [vmem:[%s100 + $0x10] sm:$0xff]
    %v104 = vld [vmem:[%s100 + $0x18] sm:$0xff]
    %v105 = vld [vmem:[%s100 + $0x20] sm:$0xff]
    %v106 = vld [vmem:[%s100 + $0x28] sm:$0xff]
    %v107 = vunpack.c.l.bf16 %v101
    %v108 = vunpack.c.h.bf16 %v101
    %v109 = vunpack.c.l.bf16 %v102
    %v110 = vunpack.c.h.bf16 %v102
    %v111 = vunpack.c.l.bf16 %v103
    %v112 = vunpack.c.h.bf16 %v103
    %v113 = vunpack.c.l.bf16 %v104
    %v114 = vunpack.c.h.bf16 %v104
    %v115 = vunpack.c.l.bf16 %v105
    %v116 = vunpack.c.h.bf16 %v105
    %v117 = vunpack.c.l.bf16 %v106
    %v118 = vunpack.c.h.bf16 %v106
    %v119 = vrot.slane %v107, 4
    %v120 = vadd.f32 %v107, %v119
    %v121 = vrot.slane %v120, 2
    %v122 = vadd.f32 %v120, %v121
    %v123 = vrot.slane %v122, 1
    %v124 = vadd.f32 %v122, %v123
    %v125 = vrot.slane %v108, 4
    %v126 = vadd.f32 %v108, %v125
    %v127 = vrot.slane %v126, 2
    %v128 = vadd.f32 %v126, %v127
    %v129 = vrot.slane %v128, 1
    %v130 = vadd.f32 %v128, %v129
    %v131 = vrot.slane %v109, 4
    %v132 = vadd.f32 %v109, %v131
    %v133 = vrot.slane %v132, 2
    %v134 = vadd.f32 %v132, %v133
    %v135 = vrot.slane %v134, 1
    %v136 = vadd.f32 %v134, %v135
    %v137 = vrot.slane %v110, 4
    %v138 = vadd.f32 %v110, %v137
    %v139 = vrot.slane %v138, 2
    %v140 = vadd.f32 %v138, %v139
    %v141 = vrot.slane %v140, 1
    %v142 = vadd.f32 %v140, %v141
    %v143 = vrot.slane %v111, 4
    %v144 = vadd.f32 %v111, %v143
    %v145 = vrot.slane %v144, 2
    %v146 = vadd.f32 %v144, %v145
    %v147 = vrot.slane %v146, 1
    %v148 = vadd.f32 %v146, %v147
    %v149 = vrot.slane %v112, 4
    %v150 = vadd.f32 %v112, %v149
    %v151 = vrot.slane %v150, 2
    %v152 = vadd.f32 %v150, %v151
    %v153 = vrot.slane %v152, 1
    %v154 = vadd.f32 %v152, %v153
    %v155 = vrot.slane %v113, 4
    %v156 = vadd.f32 %v113, %v155
    %v157 = vrot.slane %v156, 2
    %v158 = vadd.f32 %v156, %v157
    %v159 = vrot.slane %v158, 1
    %v160 = vadd.f32 %v158, %v159
    %v161 = vrot.slane %v114, 4
    %v162 = vadd.f32 %v114, %v161
    %v163 = vrot.slane %v162, 2
    %v164 = vadd.f32 %v162, %v163
    %v165 = vrot.slane %v164, 1
    %v166 = vadd.f32 %v164, %v165
    %v167 = vrot.slane %v115, 4
    %v168 = vadd.f32 %v115, %v167
    %v169 = vrot.slane %v168, 2
    %v170 = vadd.f32 %v168, %v169
    %v171 = vrot.slane %v170, 1
    %v172 = vadd.f32 %v170, %v171
    %v173 = vrot.slane %v116, 4
    %v174 = vadd.f32 %v116, %v173
    %v175 = vrot.slane %v174, 2
    %v176 = vadd.f32 %v174, %v175
    %v177 = vrot.slane %v176, 1
    %v178 = vadd.f32 %v176, %v177
    %v179 = vrot.slane %v117, 4
    %v180 = vadd.f32 %v117, %v179
    %v181 = vrot.slane %v180, 2
    %v182 = vadd.f32 %v180, %v181
    %v183 = vrot.slane %v182, 1
    %v184 = vadd.f32 %v182, %v183
    %v185 = vrot.slane %v118, 4
    %v186 = vadd.f32 %v118, %v185
    %v187 = vrot.slane %v186, 2
    %v188 = vadd.f32 %v186, %v187
    %v189 = vrot.slane %v188, 1
    %v190 = vadd.f32 %v188, %v189
    %v191 = vadd.f32 %v124, 0.0
    %v192 = vadd.f32 %v130, 0.0
    %v193 = vadd.f32 %v136, 0.0
    %v194 = vadd.f32 %v142, 0.0
    %v195 = vadd.f32 %v148, 0.0
    %v196 = vadd.f32 %v154, 0.0
    %v197 = vadd.f32 %v160, 0.0
    %v198 = vadd.f32 %v166, 0.0
    %v199 = vadd.f32 %v172, 0.0
    %v200 = vadd.f32 %v178, 0.0
    %v201 = vadd.f32 %v184, 0.0
    %v202 = vadd.f32 %v190, 0.0
    %v203 = vmul.f32 %v191, 0.125
    %v204 = vmul.f32 %v192, 0.125
    %v205 = vmul.f32 %v193, 0.125
    %v206 = vmul.f32 %v194, 0.125
    %v207 = vmul.f32 %v195, 0.125
    %v208 = vmul.f32 %v196, 0.125
    %v209 = vmul.f32 %v197, 0.125
    %v210 = vmul.f32 %v198, 0.125
    %v211 = vmul.f32 %v199, 0.125
    %v212 = vmul.f32 %v200, 0.125
    %v213 = vmul.f32 %v201, 0.125
    %v214 = vmul.f32 %v202, 0.125
    %v215 = vld [vmem:[#allocation5] sm:$0xff]
    %v216 = vld [vmem:[#allocation5 + $0x8] sm:$0xff]
    %v217 = vld [vmem:[#allocation5 + $0x10] sm:$0xff]
    %v218 = vld [vmem:[#allocation5 + $0x18] sm:$0xff]
    %v219 = vld [vmem:[#allocation5 + $0x20] sm:$0xff]
    %v220 = vld [vmem:[#allocation5 + $0x28] sm:$0xff]
    %v221 = vld [vmem:[#allocation5 + $0x30] sm:$0xff]
    %v222 = vld [vmem:[#allocation5 + $0x38] sm:$0xff]
    %v223 = vld [vmem:[#allocation5 + $0x40] sm:$0xff]
    %v224 = vld [vmem:[#allocation5 + $0x48] sm:$0xff]
    %v225 = vld [vmem:[#allocation5 + $0x50] sm:$0xff]
    %v226 = vld [vmem:[#allocation5 + $0x58] sm:$0xff]
    %v227 = vld [vmem:[#allocation5 + $0x60] sm:$0xff]
    %v228 = vld [vmem:[#allocation5 + $0x68] sm:$0xff]
    %v229 = vld [vmem:[#allocation5 + $0x70] sm:$0xff]
    %v230 = vld [vmem:[#allocation5 + $0x78] sm:$0xff]
    %v231 = vld [vmem:[#allocation5 + $0x80] sm:$0xff]
    %v232 = vld [vmem:[#allocation5 + $0x88] sm:$0xff]
    %v233 = vld [vmem:[#allocation5 + $0x90] sm:$0xff]
    %v234 = vld [vmem:[#allocation5 + $0x98] sm:$0xff]
    %v235 = vld [vmem:[#allocation5 + $0xa0] sm:$0xff]
    %v236 = vld [vmem:[#allocation5 + $0xa8] sm:$0xff]
    %v237 = vld [vmem:[#allocation5 + $0xb0] sm:$0xff]
    %v238 = vld [vmem:[#allocation5 + $0xb8] sm:$0xff]
    %v239 = vld [vmem:[#allocation5 + $0xc0] sm:$0xff]
    %v240 = vld [vmem:[#allocation5 + $0xc8] sm:$0xff]
    %v241 = vld [vmem:[#allocation5 + $0xd0] sm:$0xff]
    %v242 = vld [vmem:[#allocation5 + $0xd8] sm:$0xff]
    %v243 = vld [vmem:[#allocation5 + $0xe0] sm:$0xff]
    %v244 = vld [vmem:[#allocation5 + $0xe8] sm:$0xff]
    %v245 = vld [vmem:[#allocation5 + $0xf0] sm:$0xff]
    %v246 = vld [vmem:[#allocation5 + $0xf8] sm:$0xff]
    %v247 = vld [vmem:[#allocation5 + $0x100] sm:$0xff]
    %v248 = vld [vmem:[#allocation5 + $0x108] sm:$0xff]
    %v249 = vld [vmem:[#allocation5 + $0x110] sm:$0xff]
    %v250 = vld [vmem:[#allocation5 + $0x118] sm:$0xff]
    %v251 = vld [vmem:[#allocation5 + $0x120] sm:$0xff]
    %v252 = vld [vmem:[#allocation5 + $0x128] sm:$0xff]
    %v253 = vld [vmem:[#allocation5 + $0x130] sm:$0xff]
    %v254 = vld [vmem:[#allocation5 + $0x138] sm:$0xff]
    %v255 = vld [vmem:[#allocation5 + $0x140] sm:$0xff]
    %v256 = vld [vmem:[#allocation5 + $0x148] sm:$0xff]
    %v257 = vld [vmem:[#allocation5 + $0x150] sm:$0xff]
    %v258 = vld [vmem:[#allocation5 + $0x158] sm:$0xff]
    %v259 = vld [vmem:[#allocation5 + $0x160] sm:$0xff]
    %v260 = vld [vmem:[#allocation5 + $0x168] sm:$0xff]
    %v261 = vld [vmem:[#allocation5 + $0x170] sm:$0xff]
    %v262 = vld [vmem:[#allocation5 + $0x178] sm:$0xff]
    %v263 = vld [vmem:[#allocation5 + $0x180] sm:$0xff]
    %v264 = vld [vmem:[#allocation5 + $0x188] sm:$0xff]
    %v265 = vld [vmem:[#allocation5 + $0x190] sm:$0xff]
    %v266 = vld [vmem:[#allocation5 + $0x198] sm:$0xff]
    %v267 = vld [vmem:[#allocation5 + $0x1a0] sm:$0xff]
    %v268 = vld [vmem:[#allocation5 + $0x1a8] sm:$0xff]
    %v269 = vld [vmem:[#allocation5 + $0x1b0] sm:$0xff]
    %v270 = vld [vmem:[#allocation5 + $0x1b8] sm:$0xff]
    %v271 = vld [vmem:[#allocation5 + $0x1c0] sm:$0xff]
    %v272 = vld [vmem:[#allocation5 + $0x1c8] sm:$0xff]
    %v273 = vld [vmem:[#allocation5 + $0x1d0] sm:$0xff]
    %v274 = vld [vmem:[#allocation5 + $0x1d8] sm:$0xff]
    %v275 = vld [vmem:[#allocation5 + $0x1e0] sm:$0xff]
    %v276 = vld [vmem:[#allocation5 + $0x1e8] sm:$0xff]
    %v277 = vld [vmem:[#allocation5 + $0x1f0] sm:$0xff]
    %v278 = vld [vmem:[#allocation5 + $0x1f8] sm:$0xff]
    %v279 = vld [vmem:[#allocation5 + $0x200] sm:$0xff]
    %v280 = vld [vmem:[#allocation5 + $0x208] sm:$0xff]
    %v281 = vld [vmem:[#allocation5 + $0x210] sm:$0xff]
    %v282 = vld [vmem:[#allocation5 + $0x218] sm:$0xff]
    %v283 = vld [vmem:[#allocation5 + $0x220] sm:$0xff]
    %v284 = vld [vmem:[#allocation5 + $0x228] sm:$0xff]
    %v285 = vld [vmem:[#allocation5 + $0x230] sm:$0xff]
    %v286 = vld [vmem:[#allocation5 + $0x238] sm:$0xff]
    %v287 = vld [vmem:[#allocation5 + $0x240] sm:$0xff]
    %v288 = vld [vmem:[#allocation5 + $0x248] sm:$0xff]
    %v289 = vld [vmem:[#allocation5 + $0x250] sm:$0xff]
    %v290 = vld [vmem:[#allocation5 + $0x258] sm:$0xff]
    %v291 = vld [vmem:[#allocation5 + $0x260] sm:$0xff]
    %v292 = vld [vmem:[#allocation5 + $0x268] sm:$0xff]
    %v293 = vld [vmem:[#allocation5 + $0x270] sm:$0xff]
    %v294 = vld [vmem:[#allocation5 + $0x278] sm:$0xff]
    %v295 = vld [vmem:[#allocation5 + $0x280] sm:$0xff]
    %v296 = vld [vmem:[#allocation5 + $0x288] sm:$0xff]
    %v297 = vld [vmem:[#allocation5 + $0x290] sm:$0xff]
    %v298 = vld [vmem:[#allocation5 + $0x298] sm:$0xff]
    %v299 = vld [vmem:[#allocation5 + $0x2a0] sm:$0xff]
    %v300 = vld [vmem:[#allocation5 + $0x2a8] sm:$0xff]
    %v301 = vld [vmem:[#allocation5 + $0x2b0] sm:$0xff]
    %v302 = vld [vmem:[#allocation5 + $0x2b8] sm:$0xff]
    %v303 = vld [vmem:[#allocation5 + $0x2c0] sm:$0xff]
    %v304 = vld [vmem:[#allocation5 + $0x2c8] sm:$0xff]
    %v305 = vld [vmem:[#allocation5 + $0x2d0] sm:$0xff]
    %v306 = vld [vmem:[#allocation5 + $0x2d8] sm:$0xff]
    %v307 = vld [vmem:[#allocation5 + $0x2e0] sm:$0xff]
    %v308 = vld [vmem:[#allocation5 + $0x2e8] sm:$0xff]
    %v309 = vld [vmem:[#allocation5 + $0x2f0] sm:$0xff]
    %v310 = vld [vmem:[#allocation5 + $0x2f8] sm:$0xff]
    %v311 = vld [vmem:[#allocation5 + $0x300] sm:$0xff]
    %v312 = vld [vmem:[#allocation5 + $0x308] sm:$0xff]
    %v313 = vld [vmem:[#allocation5 + $0x310] sm:$0xff]
    %v314 = vld [vmem:[#allocation5 + $0x318] sm:$0xff]
    %v315 = vld [vmem:[#allocation5 + $0x320] sm:$0xff]
    %v316 = vld [vmem:[#allocation5 + $0x328] sm:$0xff]
    %v317 = vld [vmem:[#allocation5 + $0x330] sm:$0xff]
    %v318 = vld [vmem:[#allocation5 + $0x338] sm:$0xff]
    %v319 = vld [vmem:[#allocation5 + $0x340] sm:$0xff]
    %v320 = vld [vmem:[#allocation5 + $0x348] sm:$0xff]
    %v321 = vld [vmem:[#allocation5 + $0x350] sm:$0xff]
    %v322 = vld [vmem:[#allocation5 + $0x358] sm:$0xff]
    %v323 = vld [vmem:[#allocation5 + $0x360] sm:$0xff]
    %v324 = vld [vmem:[#allocation5 + $0x368] sm:$0xff]
    %v325 = vld [vmem:[#allocation5 + $0x370] sm:$0xff]
    %v326 = vld [vmem:[#allocation5 + $0x378] sm:$0xff]
    %v327 = vld [vmem:[#allocation5 + $0x380] sm:$0xff]
    %v328 = vld [vmem:[#allocation5 + $0x388] sm:$0xff]
    %v329 = vld [vmem:[#allocation5 + $0x390] sm:$0xff]
    %v330 = vld [vmem:[#allocation5 + $0x398] sm:$0xff]
    %v331 = vld [vmem:[#allocation5 + $0x3a0] sm:$0xff]
    %v332 = vld [vmem:[#allocation5 + $0x3a8] sm:$0xff]
    %v333 = vld [vmem:[#allocation5 + $0x3b0] sm:$0xff]
    %v334 = vld [vmem:[#allocation5 + $0x3b8] sm:$0xff]
    %v335 = vld [vmem:[#allocation5 + $0x3c0] sm:$0xff]
    %v336 = vld [vmem:[#allocation5 + $0x3c8] sm:$0xff]
    %v337 = vld [vmem:[#allocation5 + $0x3d0] sm:$0xff]
    %v338 = vld [vmem:[#allocation5 + $0x3d8] sm:$0xff]
    %v339 = vld [vmem:[#allocation5 + $0x3e0] sm:$0xff]
    %v340 = vld [vmem:[#allocation5 + $0x3e8] sm:$0xff]
    %v341 = vld [vmem:[#allocation5 + $0x3f0] sm:$0xff]
    %v342 = vld [vmem:[#allocation5 + $0x3f8] sm:$0xff]
    %v343 = vld [vmem:[#allocation5 + $0x400] sm:$0xff]
    %v344 = vld [vmem:[#allocation5 + $0x408] sm:$0xff]
    %v345 = vld [vmem:[#allocation5 + $0x410] sm:$0xff]
    %v346 = vld [vmem:[#allocation5 + $0x418] sm:$0xff]
    %v347 = vld [vmem:[#allocation5 + $0x420] sm:$0xff]
    %v348 = vld [vmem:[#allocation5 + $0x428] sm:$0xff]
    %v349 = vld [vmem:[#allocation5 + $0x430] sm:$0xff]
    %v350 = vld [vmem:[#allocation5 + $0x438] sm:$0xff]
    %v351 = vld [vmem:[#allocation5 + $0x440] sm:$0xff]
    %v352 = vld [vmem:[#allocation5 + $0x448] sm:$0xff]
    %v353 = vld [vmem:[#allocation5 + $0x450] sm:$0xff]
    %v354 = vld [vmem:[#allocation5 + $0x458] sm:$0xff]
    %v355 = vld [vmem:[#allocation5 + $0x460] sm:$0xff]
    %v356 = vld [vmem:[#allocation5 + $0x468] sm:$0xff]
    %v357 = vld [vmem:[#allocation5 + $0x470] sm:$0xff]
    %v358 = vld [vmem:[#allocation5 + $0x478] sm:$0xff]
    %v359 = vld [vmem:[#allocation5 + $0x480] sm:$0xff]
    %v360 = vld [vmem:[#allocation5 + $0x488] sm:$0xff]
    %v361 = vld [vmem:[#allocation5 + $0x490] sm:$0xff]
    %v362 = vld [vmem:[#allocation5 + $0x498] sm:$0xff]
    %v363 = vld [vmem:[#allocation5 + $0x4a0] sm:$0xff]
    %v364 = vld [vmem:[#allocation5 + $0x4a8] sm:$0xff]
    %v365 = vld [vmem:[#allocation5 + $0x4b0] sm:$0xff]
    %v366 = vld [vmem:[#allocation5 + $0x4b8] sm:$0xff]
    %v367 = vld [vmem:[#allocation5 + $0x4c0] sm:$0xff]
    %v368 = vld [vmem:[#allocation5 + $0x4c8] sm:$0xff]
    %v369 = vld [vmem:[#allocation5 + $0x4d0] sm:$0xff]
    %v370 = vld [vmem:[#allocation5 + $0x4d8] sm:$0xff]
    %v371 = vld [vmem:[#allocation5 + $0x4e0] sm:$0xff]
    %v372 = vld [vmem:[#allocation5 + $0x4e8] sm:$0xff]
    %v373 = vld [vmem:[#allocation5 + $0x4f0] sm:$0xff]
    %v374 = vld [vmem:[#allocation5 + $0x4f8] sm:$0xff]
    %v375 = vld [vmem:[#allocation5 + $0x500] sm:$0xff]
    %v376 = vld [vmem:[#allocation5 + $0x508] sm:$0xff]
    %v377 = vld [vmem:[#allocation5 + $0x510] sm:$0xff]
    %v378 = vld [vmem:[#allocation5 + $0x518] sm:$0xff]
    %v379 = vld [vmem:[#allocation5 + $0x520] sm:$0xff]
    %v380 = vld [vmem:[#allocation5 + $0x528] sm:$0xff]
    %v381 = vld [vmem:[#allocation5 + $0x530] sm:$0xff]
    %v382 = vld [vmem:[#allocation5 + $0x538] sm:$0xff]
    %v383 = vld [vmem:[#allocation5 + $0x540] sm:$0xff]
    %v384 = vld [vmem:[#allocation5 + $0x548] sm:$0xff]
    %v385 = vld [vmem:[#allocation5 + $0x550] sm:$0xff]
    %v386 = vld [vmem:[#allocation5 + $0x558] sm:$0xff]
    %v387 = vld [vmem:[#allocation5 + $0x560] sm:$0xff]
    %v388 = vld [vmem:[#allocation5 + $0x568] sm:$0xff]
    %v389 = vld [vmem:[#allocation5 + $0x570] sm:$0xff]
    %v390 = vld [vmem:[#allocation5 + $0x578] sm:$0xff]
    %v391 = vld [vmem:[#allocation5 + $0x580] sm:$0xff]
    %v392 = vld [vmem:[#allocation5 + $0x588] sm:$0xff]
    %v393 = vld [vmem:[#allocation5 + $0x590] sm:$0xff]
    %v394 = vld [vmem:[#allocation5 + $0x598] sm:$0xff]
    %v395 = vld [vmem:[#allocation5 + $0x5a0] sm:$0xff]
    %v396 = vld [vmem:[#allocation5 + $0x5a8] sm:$0xff]
    %v397 = vld [vmem:[#allocation5 + $0x5b0] sm:$0xff]
    %v398 = vld [vmem:[#allocation5 + $0x5b8] sm:$0xff]
    %v399 = vld [vmem:[#allocation5 + $0x5c0] sm:$0xff]
    %v400 = vld [vmem:[#allocation5 + $0x5c8] sm:$0xff]
    %v401 = vld [vmem:[#allocation5 + $0x5d0] sm:$0xff]
    %v402 = vld [vmem:[#allocation5 + $0x5d8] sm:$0xff]
    %v403 = vld [vmem:[#allocation5 + $0x5e0] sm:$0xff]
    %v404 = vld [vmem:[#allocation5 + $0x5e8] sm:$0xff]
    %v405 = vld [vmem:[#allocation5 + $0x5f0] sm:$0xff]
    %v406 = vld [vmem:[#allocation5 + $0x5f8] sm:$0xff]
    %v407 = vld [vmem:[#allocation5 + $0x600] sm:$0xff]
    %v408 = vld [vmem:[#allocation5 + $0x608] sm:$0xff]
    %v409 = vld [vmem:[#allocation5 + $0x610] sm:$0xff]
    %v410 = vld [vmem:[#allocation5 + $0x618] sm:$0xff]
    %v411 = vld [vmem:[#allocation5 + $0x620] sm:$0xff]
    %v412 = vld [vmem:[#allocation5 + $0x628] sm:$0xff]
    %v413 = vld [vmem:[#allocation5 + $0x630] sm:$0xff]
    %v414 = vld [vmem:[#allocation5 + $0x638] sm:$0xff]
    %v415 = vld [vmem:[#allocation5 + $0x640] sm:$0xff]
    %v416 = vld [vmem:[#allocation5 + $0x648] sm:$0xff]
    %v417 = vld [vmem:[#allocation5 + $0x650] sm:$0xff]
    %v418 = vld [vmem:[#allocation5 + $0x658] sm:$0xff]
    %v419 = vld [vmem:[#allocation5 + $0x660] sm:$0xff]
    %v420 = vld [vmem:[#allocation5 + $0x668] sm:$0xff]
    %v421 = vld [vmem:[#allocation5 + $0x670] sm:$0xff]
    %v422 = vld [vmem:[#allocation5 + $0x678] sm:$0xff]
    %v423 = vld [vmem:[#allocation5 + $0x680] sm:$0xff]
    %v424 = vld [vmem:[#allocation5 + $0x688] sm:$0xff]
    %v425 = vld [vmem:[#allocation5 + $0x690] sm:$0xff]
    %v426 = vld [vmem:[#allocation5 + $0x698] sm:$0xff]
    %v427 = vld [vmem:[#allocation5 + $0x6a0] sm:$0xff]
    %v428 = vld [vmem:[#allocation5 + $0x6a8] sm:$0xff]
    %v429 = vld [vmem:[#allocation5 + $0x6b0] sm:$0xff]
    %v430 = vld [vmem:[#allocation5 + $0x6b8] sm:$0xff]
    %v431 = vld [vmem:[#allocation5 + $0x6c0] sm:$0xff]
    %v432 = vld [vmem:[#allocation5 + $0x6c8] sm:$0xff]
    %v433 = vld [vmem:[#allocation5 + $0x6d0] sm:$0xff]
    %v434 = vld [vmem:[#allocation5 + $0x6d8] sm:$0xff]
    %v435 = vld [vmem:[#allocation5 + $0x6e0] sm:$0xff]
    %v436 = vld [vmem:[#allocation5 + $0x6e8] sm:$0xff]
    %v437 = vld [vmem:[#allocation5 + $0x6f0] sm:$0xff]
    %v438 = vld [vmem:[#allocation5 + $0x6f8] sm:$0xff]
    %v439 = vld [vmem:[#allocation5 + $0x700] sm:$0xff]
    %v440 = vld [vmem:[#allocation5 + $0x708] sm:$0xff]
    %v441 = vld [vmem:[#allocation5 + $0x710] sm:$0xff]
    %v442 = vld [vmem:[#allocation5 + $0x718] sm:$0xff]
    %v443 = vld [vmem:[#allocation5 + $0x720] sm:$0xff]
    %v444 = vld [vmem:[#allocation5 + $0x728] sm:$0xff]
    %v445 = vld [vmem:[#allocation5 + $0x730] sm:$0xff]
    %v446 = vld [vmem:[#allocation5 + $0x738] sm:$0xff]
    %v447 = vld [vmem:[#allocation5 + $0x740] sm:$0xff]
    %v448 = vld [vmem:[#allocation5 + $0x748] sm:$0xff]
    %v449 = vld [vmem:[#allocation5 + $0x750] sm:$0xff]
    %v450 = vld [vmem:[#allocation5 + $0x758] sm:$0xff]
    %v451 = vld [vmem:[#allocation5 + $0x760] sm:$0xff]
    %v452 = vld [vmem:[#allocation5 + $0x768] sm:$0xff]
    %v453 = vld [vmem:[#allocation5 + $0x770] sm:$0xff]
    %v454 = vld [vmem:[#allocation5 + $0x778] sm:$0xff]
    %v455 = vld [vmem:[#allocation5 + $0x780] sm:$0xff]
    %v456 = vld [vmem:[#allocation5 + $0x788] sm:$0xff]
    %v457 = vld [vmem:[#allocation5 + $0x790] sm:$0xff]
    %v458 = vld [vmem:[#allocation5 + $0x798] sm:$0xff]
    %v459 = vld [vmem:[#allocation5 + $0x7a0] sm:$0xff]
    %v460 = vld [vmem:[#allocation5 + $0x7a8] sm:$0xff]
    %v461 = vld [vmem:[#allocation5 + $0x7b0] sm:$0xff]
    %v462 = vld [vmem:[#allocation5 + $0x7b8] sm:$0xff]
    %v463 = vld [vmem:[#allocation5 + $0x7c0] sm:$0xff]
    %v464 = vld [vmem:[#allocation5 + $0x7c8] sm:$0xff]
    %v465 = vld [vmem:[#allocation5 + $0x7d0] sm:$0xff]
    %v466 = vld [vmem:[#allocation5 + $0x7d8] sm:$0xff]
    %v467 = vld [vmem:[#allocation5 + $0x7e0] sm:$0xff]
    %v468 = vld [vmem:[#allocation5 + $0x7e8] sm:$0xff]
    %v469 = vld [vmem:[#allocation5 + $0x7f0] sm:$0xff]
    %v470 = vld [vmem:[#allocation5 + $0x7f8] sm:$0xff]
    %v471 = vld [vmem:[#allocation5 + $0x800] sm:$0xff]
    %v472 = vld [vmem:[#allocation5 + $0x808] sm:$0xff]
    %v473 = vld [vmem:[#allocation5 + $0x810] sm:$0xff]
    %v474 = vld [vmem:[#allocation5 + $0x818] sm:$0xff]
    %v475 = vld [vmem:[#allocation5 + $0x820] sm:$0xff]
    %v476 = vld [vmem:[#allocation5 + $0x828] sm:$0xff]
    %v477 = vld [vmem:[#allocation5 + $0x830] sm:$0xff]
    %v478 = vld [vmem:[#allocation5 + $0x838] sm:$0xff]
    %v479 = vld [vmem:[#allocation5 + $0x840] sm:$0xff]
    %v480 = vld [vmem:[#allocation5 + $0x848] sm:$0xff]
    %v481 = vld [vmem:[#allocation5 + $0x850] sm:$0xff]
    %v482 = vld [vmem:[#allocation5 + $0x858] sm:$0xff]
    %v483 = vld [vmem:[#allocation5 + $0x860] sm:$0xff]
    %v484 = vld [vmem:[#allocation5 + $0x868] sm:$0xff]
    %v485 = vld [vmem:[#allocation5 + $0x870] sm:$0xff]
    %v486 = vld [vmem:[#allocation5 + $0x878] sm:$0xff]
    %v487 = vld [vmem:[#allocation5 + $0x880] sm:$0xff]
    %v488 = vld [vmem:[#allocation5 + $0x888] sm:$0xff]
    %v489 = vld [vmem:[#allocation5 + $0x890] sm:$0xff]
    %v490 = vld [vmem:[#allocation5 + $0x898] sm:$0xff]
    %v491 = vld [vmem:[#allocation5 + $0x8a0] sm:$0xff]
    %v492 = vld [vmem:[#allocation5 + $0x8a8] sm:$0xff]
    %v493 = vld [vmem:[#allocation5 + $0x8b0] sm:$0xff]
    %v494 = vld [vmem:[#allocation5 + $0x8b8] sm:$0xff]
    %v495 = vld [vmem:[#allocation5 + $0x8c0] sm:$0xff]
    %v496 = vld [vmem:[#allocation5 + $0x8c8] sm:$0xff]
    %v497 = vld [vmem:[#allocation5 + $0x8d0] sm:$0xff]
    %v498 = vld [vmem:[#allocation5 + $0x8d8] sm:$0xff]
    %v499 = vld [vmem:[#allocation5 + $0x8e0] sm:$0xff]
    %v500 = vld [vmem:[#allocation5 + $0x8e8] sm:$0xff]
    %v501 = vld [vmem:[#allocation5 + $0x8f0] sm:$0xff]
    %v502 = vld [vmem:[#allocation5 + $0x8f8] sm:$0xff]
    %v503 = vld [vmem:[#allocation5 + $0x900] sm:$0xff]
    %v504 = vld [vmem:[#allocation5 + $0x908] sm:$0xff]
    %v505 = vld [vmem:[#allocation5 + $0x910] sm:$0xff]
    %v506 = vld [vmem:[#allocation5 + $0x918] sm:$0xff]
    %v507 = vld [vmem:[#allocation5 + $0x920] sm:$0xff]
    %v508 = vld [vmem:[#allocation5 + $0x928] sm:$0xff]
    %v509 = vld [vmem:[#allocation5 + $0x930] sm:$0xff]
    %v510 = vld [vmem:[#allocation5 + $0x938] sm:$0xff]
    %v511 = vld [vmem:[#allocation5 + $0x940] sm:$0xff]
    %v512 = vld [vmem:[#allocation5 + $0x948] sm:$0xff]
    %v513 = vld [vmem:[#allocation5 + $0x950] sm:$0xff]
    %v514 = vld [vmem:[#allocation5 + $0x958] sm:$0xff]
    %v515 = vld [vmem:[#allocation5 + $0x960] sm:$0xff]
    %v516 = vld [vmem:[#allocation5 + $0x968] sm:$0xff]
    %v517 = vld [vmem:[#allocation5 + $0x970] sm:$0xff]
    %v518 = vld [vmem:[#allocation5 + $0x978] sm:$0xff]
    %v519 = vld [vmem:[#allocation5 + $0x980] sm:$0xff]
    %v520 = vld [vmem:[#allocation5 + $0x988] sm:$0xff]
    %v521 = vld [vmem:[#allocation5 + $0x990] sm:$0xff]
    %v522 = vld [vmem:[#allocation5 + $0x998] sm:$0xff]
    %v523 = vld [vmem:[#allocation5 + $0x9a0] sm:$0xff]
    %v524 = vld [vmem:[#allocation5 + $0x9a8] sm:$0xff]
    %v525 = vld [vmem:[#allocation5 + $0x9b0] sm:$0xff]
    %v526 = vld [vmem:[#allocation5 + $0x9b8] sm:$0xff]
    %v527 = vld [vmem:[#allocation5 + $0x9c0] sm:$0xff]
    %v528 = vld [vmem:[#allocation5 + $0x9c8] sm:$0xff]
    %v529 = vld [vmem:[#allocation5 + $0x9d0] sm:$0xff]
    %v530 = vld [vmem:[#allocation5 + $0x9d8] sm:$0xff]
    %v531 = vld [vmem:[#allocation5 + $0x9e0] sm:$0xff]
    %v532 = vld [vmem:[#allocation5 + $0x9e8] sm:$0xff]
    %v533 = vld [vmem:[#allocation5 + $0x9f0] sm:$0xff]
    %v534 = vld [vmem:[#allocation5 + $0x9f8] sm:$0xff]
    %v535 = vld [vmem:[#allocation5 + $0xa00] sm:$0xff]
    %v536 = vld [vmem:[#allocation5 + $0xa08] sm:$0xff]
    %v537 = vld [vmem:[#allocation5 + $0xa10] sm:$0xff]
    %v538 = vld [vmem:[#allocation5 + $0xa18] sm:$0xff]
    %v539 = vld [vmem:[#allocation5 + $0xa20] sm:$0xff]
    %v540 = vld [vmem:[#allocation5 + $0xa28] sm:$0xff]
    %v541 = vld [vmem:[#allocation5 + $0xa30] sm:$0xff]
    %v542 = vld [vmem:[#allocation5 + $0xa38] sm:$0xff]
    %v543 = vld [vmem:[#allocation5 + $0xa40] sm:$0xff]
    %v544 = vld [vmem:[#allocation5 + $0xa48] sm:$0xff]
    %v545 = vld [vmem:[#allocation5 + $0xa50] sm:$0xff]
    %v546 = vld [vmem:[#allocation5 + $0xa58] sm:$0xff]
    %v547 = vld [vmem:[#allocation5 + $0xa60] sm:$0xff]
    %v548 = vld [vmem:[#allocation5 + $0xa68] sm:$0xff]
    %v549 = vld [vmem:[#allocation5 + $0xa70] sm:$0xff]
    %v550 = vld [vmem:[#allocation5 + $0xa78] sm:$0xff]
    %v551 = vld [vmem:[#allocation5 + $0xa80] sm:$0xff]
    %v552 = vld [vmem:[#allocation5 + $0xa88] sm:$0xff]
    %v553 = vld [vmem:[#allocation5 + $0xa90] sm:$0xff]
    %v554 = vld [vmem:[#allocation5 + $0xa98] sm:$0xff]
    %v555 = vld [vmem:[#allocation5 + $0xaa0] sm:$0xff]
    %v556 = vld [vmem:[#allocation5 + $0xaa8] sm:$0xff]
    %v557 = vld [vmem:[#allocation5 + $0xab0] sm:$0xff]
    %v558 = vld [vmem:[#allocation5 + $0xab8] sm:$0xff]
    %v559 = vld [vmem:[#allocation5 + $0xac0] sm:$0xff]
    %v560 = vld [vmem:[#allocation5 + $0xac8] sm:$0xff]
    %v561 = vld [vmem:[#allocation5 + $0xad0] sm:$0xff]
    %v562 = vld [vmem:[#allocation5 + $0xad8] sm:$0xff]
    %v563 = vld [vmem:[#allocation5 + $0xae0] sm:$0xff]
    %v564 = vld [vmem:[#allocation5 + $0xae8] sm:$0xff]
    %v565 = vld [vmem:[#allocation5 + $0xaf0] sm:$0xff]
    %v566 = vld [vmem:[#allocation5 + $0xaf8] sm:$0xff]
    %v567 = vld [vmem:[#allocation5 + $0xb00] sm:$0xff]
    %v568 = vld [vmem:[#allocation5 + $0xb08] sm:$0xff]
    %v569 = vld [vmem:[#allocation5 + $0xb10] sm:$0xff]
    %v570 = vld [vmem:[#allocation5 + $0xb18] sm:$0xff]
    %v571 = vld [vmem:[#allocation5 + $0xb20] sm:$0xff]
    %v572 = vld [vmem:[#allocation5 + $0xb28] sm:$0xff]
    %v573 = vld [vmem:[#allocation5 + $0xb30] sm:$0xff]
    %v574 = vld [vmem:[#allocation5 + $0xb38] sm:$0xff]
    %v575 = vld [vmem:[#allocation5 + $0xb40] sm:$0xff]
    %v576 = vld [vmem:[#allocation5 + $0xb48] sm:$0xff]
    %v577 = vld [vmem:[#allocation5 + $0xb50] sm:$0xff]
    %v578 = vld [vmem:[#allocation5 + $0xb58] sm:$0xff]
    %v579 = vld [vmem:[#allocation5 + $0xb60] sm:$0xff]
    %v580 = vld [vmem:[#allocation5 + $0xb68] sm:$0xff]
    %v581 = vld [vmem:[#allocation5 + $0xb70] sm:$0xff]
    %v582 = vld [vmem:[#allocation5 + $0xb78] sm:$0xff]
    %v583 = vld [vmem:[#allocation5 + $0xb80] sm:$0xff]
    %v584 = vld [vmem:[#allocation5 + $0xb88] sm:$0xff]
    %v585 = vld [vmem:[#allocation5 + $0xb90] sm:$0xff]
    %v586 = vld [vmem:[#allocation5 + $0xb98] sm:$0xff]
    %v587 = vld [vmem:[#allocation5 + $0xba0] sm:$0xff]
    %v588 = vld [vmem:[#allocation5 + $0xba8] sm:$0xff]
    %v589 = vld [vmem:[#allocation5 + $0xbb0] sm:$0xff]
    %v590 = vld [vmem:[#allocation5 + $0xbb8] sm:$0xff]
    %v591 = vld [vmem:[#allocation5 + $0xbc0] sm:$0xff]
    %v592 = vld [vmem:[#allocation5 + $0xbc8] sm:$0xff]
    %v593 = vld [vmem:[#allocation5 + $0xbd0] sm:$0xff]
    %v594 = vld [vmem:[#allocation5 + $0xbd8] sm:$0xff]
    %v595 = vld [vmem:[#allocation5 + $0xbe0] sm:$0xff]
    %v596 = vld [vmem:[#allocation5 + $0xbe8] sm:$0xff]
    %v597 = vld [vmem:[#allocation5 + $0xbf0] sm:$0xff]
    %v598 = vld [vmem:[#allocation5 + $0xbf8] sm:$0xff]
    %v599 = vld [vmem:[#allocation7] sm:$0xf]
    %v601 = vperm.slane %v599, 0
    %v602 = vperm.slane %v599, 1
    %v603 = vperm.slane %v599, 2
    %v604 = vperm.slane %v599, 3
    %vm621 = vcmask 1041409
    %v622 = vsel %vm621, %v209, %v203
    %v623 = vsel %vm621, %v210, %v204
    %v624 = vsel %vm621, %v211, %v205
    %v625 = vsel %vm621, %v212, %v206
    %v626 = vsel %vm621, %v213, %v207
    %v627 = vsel %vm621, %v214, %v208
    %634 = vmatpush.msra.mxu0 %v275
    %635 = vmatpush.msra.mxu0 %v271
    %636 = vmatpush.msra.mxu0 %v267
    %637 = vmatpush.msra.mxu0 %v263
    %638 = vmatpush.msra.mxu0 %v259
    %639 = vmatpush.msra.mxu0 %v255
    %640 = vmatpush.msra.mxu0 %v251
    %641 = vmatpush.msra.mxu0 %v247
    %642 = vmatpush.msra.mxu0 %v243
    %643 = vmatpush.msra.mxu0 %v239
    %644 = vmatpush.msra.mxu0 %v235
    %645 = vmatpush.msra.mxu0 %v231
    %646 = vmatpush.msra.mxu0 %v227
    %647 = vmatpush.msra.mxu0 %v223
    %648 = vmatpush.msra.mxu0 %v219
    %649 = vmatpush.msra.mxu0 %v215
    %650 = vmatmul.f32.gmra.mxu0 %v622
    %v651 = vpop.f32.mrf.mxu0
    %v652 = vadd.f32 %v601, %v651
    %653 = vdwg.mxu0
    %654 = vmatpush.msra.mxu0 %v339
    %655 = vmatpush.msra.mxu0 %v335
    %656 = vmatpush.msra.mxu0 %v331
    %657 = vmatpush.msra.mxu0 %v327
    %658 = vmatpush.msra.mxu0 %v323
    %659 = vmatpush.msra.mxu0 %v319
    %660 = vmatpush.msra.mxu0 %v315
    %661 = vmatpush.msra.mxu0 %v311
    %662 = vmatpush.msra.mxu0 %v307
    %663 = vmatpush.msra.mxu0 %v303
    %664 = vmatpush.msra.mxu0 %v299
    %665 = vmatpush.msra.mxu0 %v295
    %666 = vmatpush.msra.mxu0 %v291
    %667 = vmatpush.msra.mxu0 %v287
    %668 = vmatpush.msra.mxu0 %v283
    %669 = vmatpush.msra.mxu0 %v279
    %670 = vmatmul.f32.gmra.mxu0 %v623
    %v671 = vpop.f32.mrf.mxu0
    %v672 = vadd.f32 %v652, %v671
    %673 = vdwg.mxu0
    %674 = vmatpush.msra.mxu0 %v403
    %675 = vmatpush.msra.mxu0 %v399
    %676 = vmatpush.msra.mxu0 %v395
    %677 = vmatpush.msra.mxu0 %v391
    %678 = vmatpush.msra.mxu0 %v387
    %679 = vmatpush.msra.mxu0 %v383
    %680 = vmatpush.msra.mxu0 %v379
    %681 = vmatpush.msra.mxu0 %v375
    %682 = vmatpush.msra.mxu0 %v371
    %683 = vmatpush.msra.mxu0 %v367
    %684 = vmatpush.msra.mxu0 %v363
    %685 = vmatpush.msra.mxu0 %v359
    %686 = vmatpush.msra.mxu0 %v355
    %687 = vmatpush.msra.mxu0 %v351
    %688 = vmatpush.msra.mxu0 %v347
    %689 = vmatpush.msra.mxu0 %v343
    %690 = vmatmul.f32.gmra.mxu0 %v624
    %v691 = vpop.f32.mrf.mxu0
    %v692 = vadd.f32 %v672, %v691
    %693 = vdwg.mxu0
    %694 = vmatpush.msra.mxu0 %v467
    %695 = vmatpush.msra.mxu0 %v463
    %696 = vmatpush.msra.mxu0 %v459
    %697 = vmatpush.msra.mxu0 %v455
    %698 = vmatpush.msra.mxu0 %v451
    %699 = vmatpush.msra.mxu0 %v447
    %700 = vmatpush.msra.mxu0 %v443
    %701 = vmatpush.msra.mxu0 %v439
    %702 = vmatpush.msra.mxu0 %v435
    %703 = vmatpush.msra.mxu0 %v431
    %704 = vmatpush.msra.mxu0 %v427
    %705 = vmatpush.msra.mxu0 %v423
    %706 = vmatpush.msra.mxu0 %v419
    %707 = vmatpush.msra.mxu0 %v415
    %708 = vmatpush.msra.mxu0 %v411
    %709 = vmatpush.msra.mxu0 %v407
    %710 = vmatmul.f32.gmra.mxu0 %v625
    %v711 = vpop.f32.mrf.mxu0
    %v712 = vadd.f32 %v692, %v711
    %713 = vdwg.mxu0
    %714 = vmatpush.msra.mxu0 %v531
    %715 = vmatpush.msra.mxu0 %v527
    %716 = vmatpush.msra.mxu0 %v523
    %717 = vmatpush.msra.mxu0 %v519
    %718 = vmatpush.msra.mxu0 %v515
    %719 = vmatpush.msra.mxu0 %v511
    %720 = vmatpush.msra.mxu0 %v507
    %721 = vmatpush.msra.mxu0 %v503
    %722 = vmatpush.msra.mxu0 %v499
    %723 = vmatpush.msra.mxu0 %v495
    %724 = vmatpush.msra.mxu0 %v491
    %725 = vmatpush.msra.mxu0 %v487
    %726 = vmatpush.msra.mxu0 %v483
    %727 = vmatpush.msra.mxu0 %v479
    %728 = vmatpush.msra.mxu0 %v475
    %729 = vmatpush.msra.mxu0 %v471
    %730 = vmatmul.f32.gmra.mxu0 %v626
    %v731 = vpop.f32.mrf.mxu0
    %v732 = vadd.f32 %v712, %v731
    %733 = vdwg.mxu0
    %734 = vmatpush.msra.mxu0 %v595
    %735 = vmatpush.msra.mxu0 %v591
    %736 = vmatpush.msra.mxu0 %v587
    %737 = vmatpush.msra.mxu0 %v583
    %738 = vmatpush.msra.mxu0 %v579
    %739 = vmatpush.msra.mxu0 %v575
    %740 = vmatpush.msra.mxu0 %v571
    %741 = vmatpush.msra.mxu0 %v567
    %742 = vmatpush.msra.mxu0 %v563
    %743 = vmatpush.msra.mxu0 %v559
    %744 = vmatpush.msra.mxu0 %v555
    %745 = vmatpush.msra.mxu0 %v551
    %746 = vmatpush.msra.mxu0 %v547
    %747 = vmatpush.msra.mxu0 %v543
    %748 = vmatpush.msra.mxu0 %v539
    %749 = vmatpush.msra.mxu0 %v535
    %750 = vmatmul.f32.gmra.mxu0 %v627
    %v751 = vpop.f32.mrf.mxu0
    %v752 = vadd.f32 %v732, %v751
    %753 = vdwg.mxu0
    %754 = vmatpush.msra.mxu0 %v276
    %755 = vmatpush.msra.mxu0 %v272
    %756 = vmatpush.msra.mxu0 %v268
    %757 = vmatpush.msra.mxu0 %v264
    %758 = vmatpush.msra.mxu0 %v260
    %759 = vmatpush.msra.mxu0 %v256
    %760 = vmatpush.msra.mxu0 %v252
    %761 = vmatpush.msra.mxu0 %v248
    %762 = vmatpush.msra.mxu0 %v244
    %763 = vmatpush.msra.mxu0 %v240
    %764 = vmatpush.msra.mxu0 %v236
    %765 = vmatpush.msra.mxu0 %v232
    %766 = vmatpush.msra.mxu0 %v228
    %767 = vmatpush.msra.mxu0 %v224
    %768 = vmatpush.msra.mxu0 %v220
    %769 = vmatpush.msra.mxu0 %v216
    %770 = vmatmul.f32.gmra.mxu0 %v622
    %v771 = vpop.f32.mrf.mxu0
    %v772 = vadd.f32 %v602, %v771
    %773 = vdwg.mxu0
    %774 = vmatpush.msra.mxu0 %v340
    %775 = vmatpush.msra.mxu0 %v336
    %776 = vmatpush.msra.mxu0 %v332
    %777 = vmatpush.msra.mxu0 %v328
    %778 = vmatpush.msra.mxu0 %v324
    %779 = vmatpush.msra.mxu0 %v320
    %780 = vmatpush.msra.mxu0 %v316
    %781 = vmatpush.msra.mxu0 %v312
    %782 = vmatpush.msra.mxu0 %v308
    %783 = vmatpush.msra.mxu0 %v304
    %784 = vmatpush.msra.mxu0 %v300
    %785 = vmatpush.msra.mxu0 %v296
    %786 = vmatpush.msra.mxu0 %v292
    %787 = vmatpush.msra.mxu0 %v288
    %788 = vmatpush.msra.mxu0 %v284
    %789 = vmatpush.msra.mxu0 %v280
    %790 = vmatmul.f32.gmra.mxu0 %v623
    %v791 = vpop.f32.mrf.mxu0
    %v792 = vadd.f32 %v772, %v791
    %793 = vdwg.mxu0
    %794 = vmatpush.msra.mxu0 %v404
    %795 = vmatpush.msra.mxu0 %v400
    %796 = vmatpush.msra.mxu0 %v396
    %797 = vmatpush.msra.mxu0 %v392
    %798 = vmatpush.msra.mxu0 %v388
    %799 = vmatpush.msra.mxu0 %v384
    %800 = vmatpush.msra.mxu0 %v380
    %801 = vmatpush.msra.mxu0 %v376
    %802 = vmatpush.msra.mxu0 %v372
    %803 = vmatpush.msra.mxu0 %v368
    %804 = vmatpush.msra.mxu0 %v364
    %805 = vmatpush.msra.mxu0 %v360
    %806 = vmatpush.msra.mxu0 %v356
    %807 = vmatpush.msra.mxu0 %v352
    %808 = vmatpush.msra.mxu0 %v348
    %809 = vmatpush.msra.mxu0 %v344
    %810 = vmatmul.f32.gmra.mxu0 %v624
    %v811 = vpop.f32.mrf.mxu0
    %v812 = vadd.f32 %v792, %v811
    %813 = vdwg.mxu0
    %814 = vmatpush.msra.mxu0 %v468
    %815 = vmatpush.msra.mxu0 %v464
    %816 = vmatpush.msra.mxu0 %v460
    %817 = vmatpush.msra.mxu0 %v456
    %818 = vmatpush.msra.mxu0 %v452
    %819 = vmatpush.msra.mxu0 %v448
    %820 = vmatpush.msra.mxu0 %v444
    %821 = vmatpush.msra.mxu0 %v440
    %822 = vmatpush.msra.mxu0 %v436
    %823 = vmatpush.msra.mxu0 %v432
    %824 = vmatpush.msra.mxu0 %v428
    %825 = vmatpush.msra.mxu0 %v424
    %826 = vmatpush.msra.mxu0 %v420
    %827 = vmatpush.msra.mxu0 %v416
    %828 = vmatpush.msra.mxu0 %v412
    %829 = vmatpush.msra.mxu0 %v408
    %830 = vmatmul.f32.gmra.mxu0 %v625
    %v831 = vpop.f32.mrf.mxu0
    %v832 = vadd.f32 %v812, %v831
    %833 = vdwg.mxu0
    %834 = vmatpush.msra.mxu0 %v532
    %835 = vmatpush.msra.mxu0 %v528
    %836 = vmatpush.msra.mxu0 %v524
    %837 = vmatpush.msra.mxu0 %v520
    %838 = vmatpush.msra.mxu0 %v516
    %839 = vmatpush.msra.mxu0 %v512
    %840 = vmatpush.msra.mxu0 %v508
    %841 = vmatpush.msra.mxu0 %v504
    %842 = vmatpush.msra.mxu0 %v500
    %843 = vmatpush.msra.mxu0 %v496
    %844 = vmatpush.msra.mxu0 %v492
    %845 = vmatpush.msra.mxu0 %v488
    %846 = vmatpush.msra.mxu0 %v484
    %847 = vmatpush.msra.mxu0 %v480
    %848 = vmatpush.msra.mxu0 %v476
    %849 = vmatpush.msra.mxu0 %v472
    %850 = vmatmul.f32.gmra.mxu0 %v626
    %v851 = vpop.f32.mrf.mxu0
    %v852 = vadd.f32 %v832, %v851
    %853 = vdwg.mxu0
    %854 = vmatpush.msra.mxu0 %v596
    %855 = vmatpush.msra.mxu0 %v592
    %856 = vmatpush.msra.mxu0 %v588
    %857 = vmatpush.msra.mxu0 %v584
    %858 = vmatpush.msra.mxu0 %v580
    %859 = vmatpush.msra.mxu0 %v576
    %860 = vmatpush.msra.mxu0 %v572
    %861 = vmatpush.msra.mxu0 %v568
    %862 = vmatpush.msra.mxu0 %v564
    %863 = vmatpush.msra.mxu0 %v560
    %864 = vmatpush.msra.mxu0 %v556
    %865 = vmatpush.msra.mxu0 %v552
    %866 = vmatpush.msra.mxu0 %v548
    %867 = vmatpush.msra.mxu0 %v544
    %868 = vmatpush.msra.mxu0 %v540
    %869 = vmatpush.msra.mxu0 %v536
    %870 = vmatmul.f32.gmra.mxu0 %v627
    %v871 = vpop.f32.mrf.mxu0
    %v872 = vadd.f32 %v852, %v871
    %873 = vdwg.mxu0
    %874 = vmatpush.msra.mxu0 %v277
    %875 = vmatpush.msra.mxu0 %v273
    %876 = vmatpush.msra.mxu0 %v269
    %877 = vmatpush.msra.mxu0 %v265
    %878 = vmatpush.msra.mxu0 %v261
    %879 = vmatpush.msra.mxu0 %v257
    %880 = vmatpush.msra.mxu0 %v253
    %881 = vmatpush.msra.mxu0 %v249
    %882 = vmatpush.msra.mxu0 %v245
    %883 = vmatpush.msra.mxu0 %v241
    %884 = vmatpush.msra.mxu0 %v237
    %885 = vmatpush.msra.mxu0 %v233
    %886 = vmatpush.msra.mxu0 %v229
    %887 = vmatpush.msra.mxu0 %v225
    %888 = vmatpush.msra.mxu0 %v221
    %889 = vmatpush.msra.mxu0 %v217
    %890 = vmatmul.f32.gmra.mxu0 %v622
    %v891 = vpop.f32.mrf.mxu0
    %v892 = vadd.f32 %v603, %v891
    %893 = vdwg.mxu0
    %894 = vmatpush.msra.mxu0 %v341
    %895 = vmatpush.msra.mxu0 %v337
    %896 = vmatpush.msra.mxu0 %v333
    %897 = vmatpush.msra.mxu0 %v329
    %898 = vmatpush.msra.mxu0 %v325
    %899 = vmatpush.msra.mxu0 %v321
    %900 = vmatpush.msra.mxu0 %v317
    %901 = vmatpush.msra.mxu0 %v313
    %902 = vmatpush.msra.mxu0 %v309
    %903 = vmatpush.msra.mxu0 %v305
    %904 = vmatpush.msra.mxu0 %v301
    %905 = vmatpush.msra.mxu0 %v297
    %906 = vmatpush.msra.mxu0 %v293
    %907 = vmatpush.msra.mxu0 %v289
    %908 = vmatpush.msra.mxu0 %v285
    %909 = vmatpush.msra.mxu0 %v281
    %910 = vmatmul.f32.gmra.mxu0 %v623
    %v911 = vpop.f32.mrf.mxu0
    %v912 = vadd.f32 %v892, %v911
    %913 = vdwg.mxu0
    %914 = vmatpush.msra.mxu0 %v405
    %915 = vmatpush.msra.mxu0 %v401
    %916 = vmatpush.msra.mxu0 %v397
    %917 = vmatpush.msra.mxu0 %v393
    %918 = vmatpush.msra.mxu0 %v389
    %919 = vmatpush.msra.mxu0 %v385
    %920 = vmatpush.msra.mxu0 %v381
    %921 = vmatpush.msra.mxu0 %v377
    %922 = vmatpush.msra.mxu0 %v373
    %923 = vmatpush.msra.mxu0 %v369
    %924 = vmatpush.msra.mxu0 %v365
    %925 = vmatpush.msra.mxu0 %v361
    %926 = vmatpush.msra.mxu0 %v357
    %927 = vmatpush.msra.mxu0 %v353
    %928 = vmatpush.msra.mxu0 %v349
    %929 = vmatpush.msra.mxu0 %v345
    %930 = vmatmul.f32.gmra.mxu0 %v624
    %v931 = vpop.f32.mrf.mxu0
    %v932 = vadd.f32 %v912, %v931
    %933 = vdwg.mxu0
    %934 = vmatpush.msra.mxu0 %v469
    %935 = vmatpush.msra.mxu0 %v465
    %936 = vmatpush.msra.mxu0 %v461
    %937 = vmatpush.msra.mxu0 %v457
    %938 = vmatpush.msra.mxu0 %v453
    %939 = vmatpush.msra.mxu0 %v449
    %940 = vmatpush.msra.mxu0 %v445
    %941 = vmatpush.msra.mxu0 %v441
    %942 = vmatpush.msra.mxu0 %v437
    %943 = vmatpush.msra.mxu0 %v433
    %944 = vmatpush.msra.mxu0 %v429
    %945 = vmatpush.msra.mxu0 %v425
    %946 = vmatpush.msra.mxu0 %v421
    %947 = vmatpush.msra.mxu0 %v417
    %948 = vmatpush.msra.mxu0 %v413
    %949 = vmatpush.msra.mxu0 %v409
    %950 = vmatmul.f32.gmra.mxu0 %v625
    %v951 = vpop.f32.mrf.mxu0
    %v952 = vadd.f32 %v932, %v951
    %953 = vdwg.mxu0
    %954 = vmatpush.msra.mxu0 %v533
    %955 = vmatpush.msra.mxu0 %v529
    %956 = vmatpush.msra.mxu0 %v525
    %957 = vmatpush.msra.mxu0 %v521
    %958 = vmatpush.msra.mxu0 %v517
    %959 = vmatpush.msra.mxu0 %v513
    %960 = vmatpush.msra.mxu0 %v509
    %961 = vmatpush.msra.mxu0 %v505
    %962 = vmatpush.msra.mxu0 %v501
    %963 = vmatpush.msra.mxu0 %v497
    %964 = vmatpush.msra.mxu0 %v493
    %965 = vmatpush.msra.mxu0 %v489
    %966 = vmatpush.msra.mxu0 %v485
    %967 = vmatpush.msra.mxu0 %v481
    %968 = vmatpush.msra.mxu0 %v477
    %969 = vmatpush.msra.mxu0 %v473
    %970 = vmatmul.f32.gmra.mxu0 %v626
    %v971 = vpop.f32.mrf.mxu0
    %v972 = vadd.f32 %v952, %v971
    %973 = vdwg.mxu0
    %974 = vmatpush.msra.mxu0 %v597
    %975 = vmatpush.msra.mxu0 %v593
    %976 = vmatpush.msra.mxu0 %v589
    %977 = vmatpush.msra.mxu0 %v585
    %978 = vmatpush.msra.mxu0 %v581
    %979 = vmatpush.msra.mxu0 %v577
    %980 = vmatpush.msra.mxu0 %v573
    %981 = vmatpush.msra.mxu0 %v569
    %982 = vmatpush.msra.mxu0 %v565
    %983 = vmatpush.msra.mxu0 %v561
    %984 = vmatpush.msra.mxu0 %v557
    %985 = vmatpush.msra.mxu0 %v553
    %986 = vmatpush.msra.mxu0 %v549
    %987 = vmatpush.msra.mxu0 %v545
    %988 = vmatpush.msra.mxu0 %v541
    %989 = vmatpush.msra.mxu0 %v537
    %990 = vmatmul.f32.gmra.mxu0 %v627
    %v991 = vpop.f32.mrf.mxu0
    %v992 = vadd.f32 %v972, %v991
    %993 = vdwg.mxu0
    %994 = vmatpush.msra.mxu0 %v278
    %995 = vmatpush.msra.mxu0 %v274
    %996 = vmatpush.msra.mxu0 %v270
    %997 = vmatpush.msra.mxu0 %v266
    %998 = vmatpush.msra.mxu0 %v262
    %999 = vmatpush.msra.mxu0 %v258
    %1000 = vmatpush.msra.mxu0 %v254
    %1001 = vmatpush.msra.mxu0 %v250
    %1002 = vmatpush.msra.mxu0 %v246
    %1003 = vmatpush.msra.mxu0 %v242
    %1004 = vmatpush.msra.mxu0 %v238
    %1005 = vmatpush.msra.mxu0 %v234
    %1006 = vmatpush.msra.mxu0 %v230
    %1007 = vmatpush.msra.mxu0 %v226
    %1008 = vmatpush.msra.mxu0 %v222
    %1009 = vmatpush.msra.mxu0 %v218
    %1010 = vmatmul.f32.gmra.mxu0 %v622
    %v1011 = vpop.f32.mrf.mxu0
    %v1012 = vadd.f32 %v604, %v1011
    %1013 = vdwg.mxu0
    %1014 = vmatpush.msra.mxu0 %v342
    %1015 = vmatpush.msra.mxu0 %v338
    %1016 = vmatpush.msra.mxu0 %v334
    %1017 = vmatpush.msra.mxu0 %v330
    %1018 = vmatpush.msra.mxu0 %v326
    %1019 = vmatpush.msra.mxu0 %v322
    %1020 = vmatpush.msra.mxu0 %v318
    %1021 = vmatpush.msra.mxu0 %v314
    %1022 = vmatpush.msra.mxu0 %v310
    %1023 = vmatpush.msra.mxu0 %v306
    %1024 = vmatpush.msra.mxu0 %v302
    %1025 = vmatpush.msra.mxu0 %v298
    %1026 = vmatpush.msra.mxu0 %v294
    %1027 = vmatpush.msra.mxu0 %v290
    %1028 = vmatpush.msra.mxu0 %v286
    %1029 = vmatpush.msra.mxu0 %v282
    %1030 = vmatmul.f32.gmra.mxu0 %v623
    %v1031 = vpop.f32.mrf.mxu0
    %v1032 = vadd.f32 %v1012, %v1031
    %1033 = vdwg.mxu0
    %1034 = vmatpush.msra.mxu0 %v406
    %1035 = vmatpush.msra.mxu0 %v402
    %1036 = vmatpush.msra.mxu0 %v398
    %1037 = vmatpush.msra.mxu0 %v394
    %1038 = vmatpush.msra.mxu0 %v390
    %1039 = vmatpush.msra.mxu0 %v386
    %1040 = vmatpush.msra.mxu0 %v382
    %1041 = vmatpush.msra.mxu0 %v378
    %1042 = vmatpush.msra.mxu0 %v374
    %1043 = vmatpush.msra.mxu0 %v370
    %1044 = vmatpush.msra.mxu0 %v366
    %1045 = vmatpush.msra.mxu0 %v362
    %1046 = vmatpush.msra.mxu0 %v358
    %1047 = vmatpush.msra.mxu0 %v354
    %1048 = vmatpush.msra.mxu0 %v350
    %1049 = vmatpush.msra.mxu0 %v346
    %1050 = vmatmul.f32.gmra.mxu0 %v624
    %v1051 = vpop.f32.mrf.mxu0
    %v1052 = vadd.f32 %v1032, %v1051
    %1053 = vdwg.mxu0
    %1054 = vmatpush.msra.mxu0 %v470
    %1055 = vmatpush.msra.mxu0 %v466
    %1056 = vmatpush.msra.mxu0 %v462
    %1057 = vmatpush.msra.mxu0 %v458
    %1058 = vmatpush.msra.mxu0 %v454
    %1059 = vmatpush.msra.mxu0 %v450
    %1060 = vmatpush.msra.mxu0 %v446
    %1061 = vmatpush.msra.mxu0 %v442
    %1062 = vmatpush.msra.mxu0 %v438
    %1063 = vmatpush.msra.mxu0 %v434
    %1064 = vmatpush.msra.mxu0 %v430
    %1065 = vmatpush.msra.mxu0 %v426
    %1066 = vmatpush.msra.mxu0 %v422
    %1067 = vmatpush.msra.mxu0 %v418
    %1068 = vmatpush.msra.mxu0 %v414
    %1069 = vmatpush.msra.mxu0 %v410
    %1070 = vmatmul.f32.gmra.mxu0 %v625
    %v1071 = vpop.f32.mrf.mxu0
    %v1072 = vadd.f32 %v1052, %v1071
    %1073 = vdwg.mxu0
    %1074 = vmatpush.msra.mxu0 %v534
    %1075 = vmatpush.msra.mxu0 %v530
    %1076 = vmatpush.msra.mxu0 %v526
    %1077 = vmatpush.msra.mxu0 %v522
    %1078 = vmatpush.msra.mxu0 %v518
    %1079 = vmatpush.msra.mxu0 %v514
    %1080 = vmatpush.msra.mxu0 %v510
    %1081 = vmatpush.msra.mxu0 %v506
    %1082 = vmatpush.msra.mxu0 %v502
    %1083 = vmatpush.msra.mxu0 %v498
    %1084 = vmatpush.msra.mxu0 %v494
    %1085 = vmatpush.msra.mxu0 %v490
    %1086 = vmatpush.msra.mxu0 %v486
    %1087 = vmatpush.msra.mxu0 %v482
    %1088 = vmatpush.msra.mxu0 %v478
    %1089 = vmatpush.msra.mxu0 %v474
    %1090 = vmatmul.f32.gmra.mxu0 %v626
    %v1091 = vpop.f32.mrf.mxu0
    %v1092 = vadd.f32 %v1072, %v1091
    %1093 = vdwg.mxu0
    %1094 = vmatpush.msra.mxu0 %v598
    %1095 = vmatpush.msra.mxu0 %v594
    %1096 = vmatpush.msra.mxu0 %v590
    %1097 = vmatpush.msra.mxu0 %v586
    %1098 = vmatpush.msra.mxu0 %v582
    %1099 = vmatpush.msra.mxu0 %v578
    %1100 = vmatpush.msra.mxu0 %v574
    %1101 = vmatpush.msra.mxu0 %v570
    %1102 = vmatpush.msra.mxu0 %v566
    %1103 = vmatpush.msra.mxu0 %v562
    %1104 = vmatpush.msra.mxu0 %v558
    %1105 = vmatpush.msra.mxu0 %v554
    %1106 = vmatpush.msra.mxu0 %v550
    %1107 = vmatpush.msra.mxu0 %v546
    %1108 = vmatpush.msra.mxu0 %v542
    %1109 = vmatpush.msra.mxu0 %v538
    %1110 = vmatmul.f32.gmra.mxu0 %v627
    %v1111 = vpop.f32.mrf.mxu0
    %v1112 = vadd.f32 %v1092, %v1111
    %1113 = vdwg.mxu0
    %v1118 = vrot.slane %v872, 6
    %v1119 = vrot.slane %v992, 4
    %v1120 = vrot.slane %v1112, 2
    %vm1121 = vcmask 1041408
    %v1122 = vsel %vm1121, %v752, %v1118
    %vm1123 = vcmask 1045508
    %v1124 = vsel %vm1123, %v1119, %v1120
    %vm1125 = vcmask 1043456
    %v1126 = vsel %vm1125, %v1122, %v1124
    %1128 = vst [vmem:[#allocation12] sm:$0xff] %v1126
    %v1129 = vld [vmem:[#allocation8] sm:$0xff]
    %v1130 = vld [vmem:[#allocation8 + $0x8] sm:$0xff]
    %v1131 = vld [vmem:[#allocation8 + $0x10] sm:$0xff]
    %v1132 = vld [vmem:[#allocation8 + $0x18] sm:$0xff]
    %v1133 = vld [vmem:[#allocation8 + $0x20] sm:$0xff]
    %v1134 = vld [vmem:[#allocation8 + $0x28] sm:$0xff]
    %v1135 = vld [vmem:[#allocation8 + $0x30] sm:$0xff]
    %v1136 = vld [vmem:[#allocation8 + $0x38] sm:$0xff]
    %v1137 = vld [vmem:[#allocation8 + $0x40] sm:$0xff]
    %v1138 = vld [vmem:[#allocation8 + $0x48] sm:$0xff]
    %v1139 = vld [vmem:[#allocation8 + $0x50] sm:$0xff]
    %v1140 = vld [vmem:[#allocation8 + $0x58] sm:$0xff]
    %v1141 = vld [vmem:[#allocation8 + $0x60] sm:$0xff]
    %v1142 = vld [vmem:[#allocation8 + $0x68] sm:$0xff]
    %v1143 = vld [vmem:[#allocation8 + $0x70] sm:$0xff]
    %v1144 = vld [vmem:[#allocation8 + $0x78] sm:$0xff]
    %v1145 = vld [vmem:[#allocation8 + $0x80] sm:$0xff]
    %v1146 = vld [vmem:[#allocation8 + $0x88] sm:$0xff]
    %v1147 = vld [vmem:[#allocation8 + $0x90] sm:$0xff]
    %v1148 = vld [vmem:[#allocation8 + $0x98] sm:$0xff]
    %v1149 = vld [vmem:[#allocation8 + $0xa0] sm:$0xff]
    %v1150 = vld [vmem:[#allocation8 + $0xa8] sm:$0xff]
    %v1151 = vld [vmem:[#allocation8 + $0xb0] sm:$0xff]
    %v1152 = vld [vmem:[#allocation8 + $0xb8] sm:$0xff]
    %v1153 = vld [vmem:[#allocation8 + $0xc0] sm:$0xff]
    %v1154 = vld [vmem:[#allocation8 + $0xc8] sm:$0xff]
    %v1155 = vld [vmem:[#allocation8 + $0xd0] sm:$0xff]
    %v1156 = vld [vmem:[#allocation8 + $0xd8] sm:$0xff]
    %v1157 = vld [vmem:[#allocation8 + $0xe0] sm:$0xff]
    %v1158 = vld [vmem:[#allocation8 + $0xe8] sm:$0xff]
    %v1159 = vld [vmem:[#allocation8 + $0xf0] sm:$0xff]
    %v1160 = vld [vmem:[#allocation8 + $0xf8] sm:$0xff]
    %v1161 = vld [vmem:[#allocation8 + $0x100] sm:$0xff]
    %v1162 = vld [vmem:[#allocation8 + $0x108] sm:$0xff]
    %v1163 = vld [vmem:[#allocation8 + $0x110] sm:$0xff]
    %v1164 = vld [vmem:[#allocation8 + $0x118] sm:$0xff]
    %v1165 = vld [vmem:[#allocation8 + $0x120] sm:$0xff]
    %v1166 = vld [vmem:[#allocation8 + $0x128] sm:$0xff]
    %v1167 = vld [vmem:[#allocation8 + $0x130] sm:$0xff]
    %v1168 = vld [vmem:[#allocation8 + $0x138] sm:$0xff]
    %v1169 = vld [vmem:[#allocation8 + $0x140] sm:$0xff]
    %v1170 = vld [vmem:[#allocation8 + $0x148] sm:$0xff]
    %v1171 = vld [vmem:[#allocation8 + $0x150] sm:$0xff]
    %v1172 = vld [vmem:[#allocation8 + $0x158] sm:$0xff]
    %v1173 = vld [vmem:[#allocation8 + $0x160] sm:$0xff]
    %v1174 = vld [vmem:[#allocation8 + $0x168] sm:$0xff]
    %v1175 = vld [vmem:[#allocation8 + $0x170] sm:$0xff]
    %v1176 = vld [vmem:[#allocation8 + $0x178] sm:$0xff]
    %v1177 = vld [vmem:[#allocation8 + $0x180] sm:$0xff]
    %v1178 = vld [vmem:[#allocation8 + $0x188] sm:$0xff]
    %v1179 = vld [vmem:[#allocation8 + $0x190] sm:$0xff]
    %v1180 = vld [vmem:[#allocation8 + $0x198] sm:$0xff]
    %v1181 = vld [vmem:[#allocation8 + $0x1a0] sm:$0xff]
    %v1182 = vld [vmem:[#allocation8 + $0x1a8] sm:$0xff]
    %v1183 = vld [vmem:[#allocation8 + $0x1b0] sm:$0xff]
    %v1184 = vld [vmem:[#allocation8 + $0x1b8] sm:$0xff]
    %v1185 = vld [vmem:[#allocation8 + $0x1c0] sm:$0xff]
    %v1186 = vld [vmem:[#allocation8 + $0x1c8] sm:$0xff]
    %v1187 = vld [vmem:[#allocation8 + $0x1d0] sm:$0xff]
    %v1188 = vld [vmem:[#allocation8 + $0x1d8] sm:$0xff]
    %v1189 = vld [vmem:[#allocation8 + $0x1e0] sm:$0xff]
    %v1190 = vld [vmem:[#allocation8 + $0x1e8] sm:$0xff]
    %v1191 = vld [vmem:[#allocation8 + $0x1f0] sm:$0xff]
    %v1192 = vld [vmem:[#allocation8 + $0x1f8] sm:$0xff]
    %v1193 = vld [vmem:[#allocation10] sm:$0x1]
    %v1195 = vperm.slane %v1193, 0
    %1197 = vmatpush.msra.mxu0 %v1144
    %1198 = vmatpush.msra.mxu0 %v1143
    %1199 = vmatpush.msra.mxu0 %v1142
    %1200 = vmatpush.msra.mxu0 %v1141
    %1201 = vmatpush.msra.mxu0 %v1140
    %1202 = vmatpush.msra.mxu0 %v1139
    %1203 = vmatpush.msra.mxu0 %v1138
    %1204 = vmatpush.msra.mxu0 %v1137
    %1205 = vmatpush.msra.mxu0 %v1136
    %1206 = vmatpush.msra.mxu0 %v1135
    %1207 = vmatpush.msra.mxu0 %v1134
    %1208 = vmatpush.msra.mxu0 %v1133
    %1209 = vmatpush.msra.mxu0 %v1132
    %1210 = vmatpush.msra.mxu0 %v1131
    %1211 = vmatpush.msra.mxu0 %v1130
    %1212 = vmatpush.msra.mxu0 %v1129
    %1213 = vmatmul.f32.gmra.mxu0 %v752
    %v1214 = vpop.f32.mrf.mxu0
    %v1215 = vadd.f32 %v1195, %v1214
    %1216 = vdwg.mxu0
    %1217 = vmatpush.msra.mxu0 %v1160
    %1218 = vmatpush.msra.mxu0 %v1159
    %1219 = vmatpush.msra.mxu0 %v1158
    %1220 = vmatpush.msra.mxu0 %v1157
    %1221 = vmatpush.msra.mxu0 %v1156
    %1222 = vmatpush.msra.mxu0 %v1155
    %1223 = vmatpush.msra.mxu0 %v1154
    %1224 = vmatpush.msra.mxu0 %v1153
    %1225 = vmatpush.msra.mxu0 %v1152
    %1226 = vmatpush.msra.mxu0 %v1151
    %1227 = vmatpush.msra.mxu0 %v1150
    %1228 = vmatpush.msra.mxu0 %v1149
    %1229 = vmatpush.msra.mxu0 %v1148
    %1230 = vmatpush.msra.mxu0 %v1147
    %1231 = vmatpush.msra.mxu0 %v1146
    %1232 = vmatpush.msra.mxu0 %v1145
    %1233 = vmatmul.f32.gmra.mxu0 %v872
    %v1234 = vpop.f32.mrf.mxu0
    %v1235 = vadd.f32 %v1215, %v1234
    %1236 = vdwg.mxu0
    %1237 = vmatpush.msra.mxu0 %v1176
    %1238 = vmatpush.msra.mxu0 %v1175
    %1239 = vmatpush.msra.mxu0 %v1174
    %1240 = vmatpush.msra.mxu0 %v1173
    %1241 = vmatpush.msra.mxu0 %v1172
    %1242 = vmatpush.msra.mxu0 %v1171
    %1243 = vmatpush.msra.mxu0 %v1170
    %1244 = vmatpush.msra.mxu0 %v1169
    %1245 = vmatpush.msra.mxu0 %v1168
    %1246 = vmatpush.msra.mxu0 %v1167
    %1247 = vmatpush.msra.mxu0 %v1166
    %1248 = vmatpush.msra.mxu0 %v1165
    %1249 = vmatpush.msra.mxu0 %v1164
    %1250 = vmatpush.msra.mxu0 %v1163
    %1251 = vmatpush.msra.mxu0 %v1162
    %1252 = vmatpush.msra.mxu0 %v1161
    %1253 = vmatmul.f32.gmra.mxu0 %v992
    %v1254 = vpop.f32.mrf.mxu0
    %v1255 = vadd.f32 %v1235, %v1254
    %1256 = vdwg.mxu0
    %1257 = vmatpush.msra.mxu0 %v1192
    %1258 = vmatpush.msra.mxu0 %v1191
    %1259 = vmatpush.msra.mxu0 %v1190
    %1260 = vmatpush.msra.mxu0 %v1189
    %1261 = vmatpush.msra.mxu0 %v1188
    %1262 = vmatpush.msra.mxu0 %v1187
    %1263 = vmatpush.msra.mxu0 %v1186
    %1264 = vmatpush.msra.mxu0 %v1185
    %1265 = vmatpush.msra.mxu0 %v1184
    %1266 = vmatpush.msra.mxu0 %v1183
    %1267 = vmatpush.msra.mxu0 %v1182
    %1268 = vmatpush.msra.mxu0 %v1181
    %1269 = vmatpush.msra.mxu0 %v1180
    %1270 = vmatpush.msra.mxu0 %v1179
    %1271 = vmatpush.msra.mxu0 %v1178
    %1272 = vmatpush.msra.mxu0 %v1177
    %1273 = vmatmul.f32.gmra.mxu0 %v1112
    %v1274 = vpop.f32.mrf.mxu0
    %v1275 = vadd.f32 %v1255, %v1274
    %1276 = vdwg.mxu0
    %1277 = vst [vmem:[#allocation11] sm:$0x3] %v1275
    // Predicated region
    $region42: #{tpu_custom_call.1} parent=1 // pred_check
      _
    $region43: #{tpu_custom_call.1} parent=1 // pred_check_branch
      %1279 = sbr.rel (0) target = $region45
    $region44: #{tpu_custom_call.1} parent=1 // pred_region
      %1281 = vsyncadd [#allocation4], 0
      %s1283 = sshll.u32 [#allocation11], 4
      %s1284 = int_to_ptr.vmem [resolvable:$true] %s1283
      %s1285 = sshll.u32 %s5, 4
      %s1286 = int_to_ptr.hbm [resolvable:$true] %s1285
      %1288 = dma.vmem_to_hbm [thread:$0]  %s1284, 32, %s1286, [#allocation4]
    $region45: #{tpu_custom_call.1} parent=1 // pred_fallthru
      _
    // Predicated region
    $region46: #{tpu_custom_call.1} parent=1 // pred_check
      _
    $region47: #{tpu_custom_call.1} parent=1 // pred_check_branch
      %1290 = sbr.rel (0) target = $region49
    $region48: #{tpu_custom_call.1} parent=1 // pred_region
      %1292 = vsyncadd [#allocation13], 0
      %s1294 = sshll.u32 [#allocation12], 4
      %s1295 = int_to_ptr.vmem [resolvable:$true] %s1294
      %s1296 = sshll.u32 %s6, 4
      %s1297 = int_to_ptr.hbm [resolvable:$true] %s1296
      %1299 = dma.vmem_to_hbm [thread:$0]  %s1295, 128, %s1297, [#allocation13]
    $region49: #{tpu_custom_call.1} parent=1 // pred_fallthru
      _
    // Predicated region
    $region50: #{tpu_custom_call.1} parent=1 // pred_check
      _
    $region51: #{tpu_custom_call.1} parent=1 // pred_check_branch
      %1301 = sbr.rel (0) target = $region53
    $region52: #{tpu_custom_call.1} parent=1 // pred_region
      %1303 = dma.done [#allocation4], 32
    $region53: #{tpu_custom_call.1} parent=1 // pred_fallthru
      _
    // Predicated region
    $region54: #{tpu_custom_call.1} parent=1 // pred_check
      _
    $region55: #{tpu_custom_call.1} parent=1 // pred_check_branch
      %1305 = sbr.rel (0) target = $region57
    $region56: #{tpu_custom_call.1} parent=1 // pred_region
      %1307 = dma.done [#allocation13], 128
    $region57: #{tpu_custom_call.1} parent=1 // pred_fallthru
      _
    %1308 = vsyncpa [#allocation3], 1
    %1309 = vsyncpa [#allocation6], 1
    %1310 = vsyncpa [#allocation9], 1
    %1311 = vsyncpa [#allocation4], 1
    %1312 = vsyncpa [#allocation13], 1

</llo_original>
